<compile_context>
chip_gen: v6e
topology: v6e:2x2x1
jax: 0.10.0
libtpu: 0.0.40
codegen_flags: <defaults>
</compile_context>

<pallas_src>
import functools

import jax
import jax.numpy as jnp
import numpy as np
from jax.experimental import pallas as pl
from jax.experimental.pallas import tpu as pltpu


def _convl_kernel(x_ref, w_ref, shift_ref, out_ref, *, w_out, n_out):
    """One batch element.

    x_ref    : (Cin, P_in)     padded image, flattened row-major (+ tail zeros)
    w_ref    : (9, Cout, Cin)  conv weights with BN scale folded in
    shift_ref: (Cout, 1)       folded conv-bias/BN shift (f32)
    out_ref  : (Cout, n_out)   n_out = H*(W+2); junk cols sliced off by wrapper
    """
    x = x_ref[...]                                    # single VMEM load
    wp2 = w_out + 2                                   # padded row stride
    acc = None
    for t in range(9):                                # in-kernel im2col: 9 taps
        ky, kx = divmod(t, 3)
        off = ky * wp2 + kx
        tap = x[:, off:off + n_out]                   # (Cin, n_out) shifted slice
        part = jnp.dot(w_ref[t], tap, preferred_element_type=jnp.float32)
        acc = part if acc is None else acc + part     # (Cout, n_out) f32 acc
    y = acc + shift_ref[...]                          # conv bias + eval-mode BN
    y = jnp.where(y >= 0.0, y, 0.01 * y)              # LeakyReLU (PyTorch default)
    out_ref[...] = y.astype(out_ref.dtype)


def convl_forward(x, w, b, gamma, beta, run_mean, run_var, eps=1e-5,
                  compute_dtype=jnp.bfloat16, out_dtype=jnp.float32):
    """ConvL forward.  x: (B, Cin, H, W) NCHW, w: (Cout, Cin, 3, 3) OIHW.
    Returns (B, Cout, H, W) in out_dtype.  BatchNorm uses running stats."""
    B, Cin, H, W = x.shape
    Cout = w.shape[0]
    Wp2 = W + 2
    n_out = H * Wp2                       # output incl. 2 junk columns per row
    p_in = (H + 3) * Wp2                  # 1 halo row top, 2 bottom (covers max tap offset)

    # ---- wrapper glue: one halo pad + free reshape; BN scale folded into W ----
    x_pad = jnp.pad(x, ((0, 0), (0, 0), (1, 2), (1, 1)))
    x_flat = x_pad.reshape(B, Cin, p_in).astype(compute_dtype)

    scale = (gamma / jnp.sqrt(run_var + eps)).astype(jnp.float32)
    shift = (beta + (b - run_mean) * scale).astype(jnp.float32).reshape(Cout, 1)
    w_fold = w.astype(jnp.float32) * scale[:, None, None, None]
    w_taps = jnp.transpose(w_fold, (2, 3, 0, 1)).reshape(9, Cout, Cin)
    w_taps = w_taps.astype(compute_dtype)

    kernel = functools.partial(_convl_kernel, w_out=W, n_out=n_out)

    # VMEM budget: double-buffered input/output blocks + resident weights + headroom.
    in_b = 2 if compute_dtype == jnp.bfloat16 else 4
    out_b = 2 if out_dtype == jnp.bfloat16 else 4
    vmem_est = (2 * (Cin * p_in * in_b + Cout * n_out * out_b)
                + 2 * 9 * Cout * Cin * in_b + Cout * n_out * 4 + (4 << 20))
    vmem_limit = int(min(max(2 * vmem_est, 16 << 20), 64 << 20))

    out = pl.pallas_call(
        kernel,
        out_shape=jax.ShapeDtypeStruct((B, Cout, n_out), out_dtype),
        grid_spec=pltpu.PrefetchScalarGridSpec(
            num_scalar_prefetch=0,
            grid=(B,),
            in_specs=[
                pl.BlockSpec((pl.Squeezed(), Cin, p_in), lambda bi: (bi, 0, 0)),
                pl.BlockSpec((9, Cout, Cin), lambda bi: (0, 0, 0)),   # resident
                pl.BlockSpec((Cout, 1), lambda bi: (0, 0)),           # resident
            ],
            out_specs=pl.BlockSpec((pl.Squeezed(), Cout, n_out),
                                   lambda bi: (bi, 0, 0)),
        ),
        compiler_params=pltpu.CompilerParams(
            dimension_semantics=("parallel",),
            vmem_limit_bytes=vmem_limit),
    )(x_flat, w_taps, shift)

    # (B, Cout, H, W+2) -> drop the 2 junk columns per row; no transposes.
    return out.reshape(B, Cout, H, Wp2)[..., :W]


def ref_forward(x, w, b, gamma, beta, run_mean, run_var, eps=1e-5):
    """Pure-JAX reference for ConvL (Conv2d 3x3 s1 p1 + eval BN + LeakyReLU)."""
    y = jax.lax.conv_general_dilated(
        x, w, window_strides=(1, 1), padding="SAME",
        dimension_numbers=("NCHW", "OIHW", "NCHW"),
        precision=jax.lax.Precision.HIGHEST)
    y = y + b[None, :, None, None]
    inv = gamma / jnp.sqrt(run_var + eps)
    y = (y - run_mean[None, :, None, None]) * inv[None, :, None, None] \
        + beta[None, :, None, None]
    return jnp.where(y >= 0.0, y, 0.01 * y)


if __name__ == "__main__":
    key = jax.random.PRNGKey(0)
    B, Cin, Cout, H, W = 2, 4, 4, 16, 16
    ks = jax.random.split(key, 7)

    x = jax.random.normal(ks[0], (B, Cin, H, W), dtype=jnp.float32)
    w = jax.random.normal(ks[1], (Cout, Cin, 3, 3), dtype=jnp.float32) * 0.2
    b = jax.random.normal(ks[2], (Cout,), dtype=jnp.float32) * 0.1
    gamma = 1.0 + 0.3 * jax.random.normal(ks[3], (Cout,), dtype=jnp.float32)
    beta = 0.1 * jax.random.normal(ks[4], (Cout,), dtype=jnp.float32)
    run_mean = 0.1 * jax.random.normal(ks[5], (Cout,), dtype=jnp.float32)
    run_var = jax.random.uniform(ks[6], (Cout,), minval=0.5, maxval=1.5,
                                 dtype=jnp.float32)
    eps = 1e-5

    y_ref = ref_forward(x, w, b, gamma, beta, run_mean, run_var, eps)

    # f32 MXU path (tight correctness check).
    y_f32 = jax.block_until_ready(
        convl_forward(x, w, b, gamma, beta, run_mean, run_var, eps,
                      compute_dtype=jnp.float32))
    np.testing.assert_allclose(np.asarray(y_f32), np.asarray(y_ref),
                               atol=1e-4, rtol=1e-4)

    # Default path: bf16 MXU operands, f32 accumulation (recommended on v5e/v6e/v7x).
    y_bf16 = jax.block_until_ready(
        convl_forward(x, w, b, gamma, beta, run_mean, run_var, eps))
    np.testing.assert_allclose(np.asarray(y_bf16), np.asarray(y_ref),
                               atol=5e-2, rtol=5e-2)

    print("KERNEL_OK")
</pallas_src>

<mosaic_0001>
module attributes {stable_mosaic.version = 11 : i64} {
  func.func @_convl_kernel(%arg0: i32, %arg1: memref<1x4x342xf32, #tpu.memory_space<vmem>>, %arg2: memref<9x4x4xf32, #tpu.memory_space<vmem>>, %arg3: memref<4x1xf32, #tpu.memory_space<vmem>>, %arg4: memref<1x4x288xf32, #tpu.memory_space<vmem>>) attributes {dimension_semantics = [#tpu.dimension_semantics<parallel>], iteration_bounds = array<i64: 2>, scalar_prefetch = 0 : i64, scratch_operands = 0 : i64, tpu.core_type = #tpu.core_type<tc>, window_params = [{transform_indices = @transform_0, window_bounds = array<i64: 1, 4, 342>}, {pipeline_mode = #tpu.pipeline_mode<synchronous>, transform_indices = @transform_1, window_bounds = array<i64: 9, 4, 4>}, {pipeline_mode = #tpu.pipeline_mode<synchronous>, transform_indices = @transform_2, window_bounds = array<i64: 4, 1>}, {transform_indices = @transform_3, window_bounds = array<i64: 1, 4, 288>}]} {
    %c0 = arith.constant 0 : index
    %c0_0 = arith.constant 0 : index
    %c0_1 = arith.constant 0 : index
    %0 = vector.load %arg1[%c0, %c0_0, %c0_1] : memref<1x4x342xf32, #tpu.memory_space<vmem>>, vector<1x4x342xf32>
    %1 = vector.shape_cast %0 : vector<1x4x342xf32> to vector<4x342xf32>
    %2 = vector.extract_strided_slice %1 {offsets = [0, 0], sizes = [4, 288], strides = [1, 1]} : vector<4x342xf32> to vector<4x288xf32>
    %c0_2 = arith.constant 0 : index
    %c0_3 = arith.constant 0 : index
    %c0_4 = arith.constant 0 : index
    %3 = vector.load %arg2[%c0_2, %c0_3, %c0_4] : memref<9x4x4xf32, #tpu.memory_space<vmem>>, vector<1x4x4xf32>
    %4 = vector.shape_cast %3 : vector<1x4x4xf32> to vector<4x4xf32>
    %cst = arith.constant dense<0.000000e+00> : vector<4x288xf32>
    %5 = tpu.matmul %4, %2, %cst {dimension_numbers = #tpu.dot_dimension_numbers<[1], [0], [0], [1], [0, 0, 1, 1], [], []>} : vector<4x4xf32>, vector<4x288xf32>, vector<4x288xf32> -> vector<4x288xf32>
    %6 = vector.extract_strided_slice %1 {offsets = [0, 1], sizes = [4, 288], strides = [1, 1]} : vector<4x342xf32> to vector<4x288xf32>
    %c1 = arith.constant 1 : index
    %c0_5 = arith.constant 0 : index
    %c0_6 = arith.constant 0 : index
    %7 = vector.load %arg2[%c1, %c0_5, %c0_6] : memref<9x4x4xf32, #tpu.memory_space<vmem>>, vector<1x4x4xf32>
    %8 = vector.shape_cast %7 : vector<1x4x4xf32> to vector<4x4xf32>
    %cst_7 = arith.constant dense<0.000000e+00> : vector<4x288xf32>
    %9 = tpu.matmul %8, %6, %cst_7 {dimension_numbers = #tpu.dot_dimension_numbers<[1], [0], [0], [1], [0, 0, 1, 1], [], []>} : vector<4x4xf32>, vector<4x288xf32>, vector<4x288xf32> -> vector<4x288xf32>
    %10 = arith.addf %5, %9 : vector<4x288xf32>
    %11 = vector.extract_strided_slice %1 {offsets = [0, 2], sizes = [4, 288], strides = [1, 1]} : vector<4x342xf32> to vector<4x288xf32>
    %c2 = arith.constant 2 : index
    %c0_8 = arith.constant 0 : index
    %c0_9 = arith.constant 0 : index
    %12 = vector.load %arg2[%c2, %c0_8, %c0_9] : memref<9x4x4xf32, #tpu.memory_space<vmem>>, vector<1x4x4xf32>
    %13 = vector.shape_cast %12 : vector<1x4x4xf32> to vector<4x4xf32>
    %cst_10 = arith.constant dense<0.000000e+00> : vector<4x288xf32>
    %14 = tpu.matmul %13, %11, %cst_10 {dimension_numbers = #tpu.dot_dimension_numbers<[1], [0], [0], [1], [0, 0, 1, 1], [], []>} : vector<4x4xf32>, vector<4x288xf32>, vector<4x288xf32> -> vector<4x288xf32>
    %15 = arith.addf %10, %14 : vector<4x288xf32>
    %16 = vector.extract_strided_slice %1 {offsets = [0, 18], sizes = [4, 288], strides = [1, 1]} : vector<4x342xf32> to vector<4x288xf32>
    %c3 = arith.constant 3 : index
    %c0_11 = arith.constant 0 : index
    %c0_12 = arith.constant 0 : index
    %17 = vector.load %arg2[%c3, %c0_11, %c0_12] : memref<9x4x4xf32, #tpu.memory_space<vmem>>, vector<1x4x4xf32>
    %18 = vector.shape_cast %17 : vector<1x4x4xf32> to vector<4x4xf32>
    %cst_13 = arith.constant dense<0.000000e+00> : vector<4x288xf32>
    %19 = tpu.matmul %18, %16, %cst_13 {dimension_numbers = #tpu.dot_dimension_numbers<[1], [0], [0], [1], [0, 0, 1, 1], [], []>} : vector<4x4xf32>, vector<4x288xf32>, vector<4x288xf32> -> vector<4x288xf32>
    %20 = arith.addf %15, %19 : vector<4x288xf32>
    %21 = vector.extract_strided_slice %1 {offsets = [0, 19], sizes = [4, 288], strides = [1, 1]} : vector<4x342xf32> to vector<4x288xf32>
    %c4 = arith.constant 4 : index
    %c0_14 = arith.constant 0 : index
    %c0_15 = arith.constant 0 : index
    %22 = vector.load %arg2[%c4, %c0_14, %c0_15] : memref<9x4x4xf32, #tpu.memory_space<vmem>>, vector<1x4x4xf32>
    %23 = vector.shape_cast %22 : vector<1x4x4xf32> to vector<4x4xf32>
    %cst_16 = arith.constant dense<0.000000e+00> : vector<4x288xf32>
    %24 = tpu.matmul %23, %21, %cst_16 {dimension_numbers = #tpu.dot_dimension_numbers<[1], [0], [0], [1], [0, 0, 1, 1], [], []>} : vector<4x4xf32>, vector<4x288xf32>, vector<4x288xf32> -> vector<4x288xf32>
    %25 = arith.addf %20, %24 : vector<4x288xf32>
    %26 = vector.extract_strided_slice %1 {offsets = [0, 20], sizes = [4, 288], strides = [1, 1]} : vector<4x342xf32> to vector<4x288xf32>
    %c5 = arith.constant 5 : index
    %c0_17 = arith.constant 0 : index
    %c0_18 = arith.constant 0 : index
    %27 = vector.load %arg2[%c5, %c0_17, %c0_18] : memref<9x4x4xf32, #tpu.memory_space<vmem>>, vector<1x4x4xf32>
    %28 = vector.shape_cast %27 : vector<1x4x4xf32> to vector<4x4xf32>
    %cst_19 = arith.constant dense<0.000000e+00> : vector<4x288xf32>
    %29 = tpu.matmul %28, %26, %cst_19 {dimension_numbers = #tpu.dot_dimension_numbers<[1], [0], [0], [1], [0, 0, 1, 1], [], []>} : vector<4x4xf32>, vector<4x288xf32>, vector<4x288xf32> -> vector<4x288xf32>
    %30 = arith.addf %25, %29 : vector<4x288xf32>
    %31 = vector.extract_strided_slice %1 {offsets = [0, 36], sizes = [4, 288], strides = [1, 1]} : vector<4x342xf32> to vector<4x288xf32>
    %c6 = arith.constant 6 : index
    %c0_20 = arith.constant 0 : index
    %c0_21 = arith.constant 0 : index
    %32 = vector.load %arg2[%c6, %c0_20, %c0_21] : memref<9x4x4xf32, #tpu.memory_space<vmem>>, vector<1x4x4xf32>
    %33 = vector.shape_cast %32 : vector<1x4x4xf32> to vector<4x4xf32>
    %cst_22 = arith.constant dense<0.000000e+00> : vector<4x288xf32>
    %34 = tpu.matmul %33, %31, %cst_22 {dimension_numbers = #tpu.dot_dimension_numbers<[1], [0], [0], [1], [0, 0, 1, 1], [], []>} : vector<4x4xf32>, vector<4x288xf32>, vector<4x288xf32> -> vector<4x288xf32>
    %35 = arith.addf %30, %34 : vector<4x288xf32>
    %36 = vector.extract_strided_slice %1 {offsets = [0, 37], sizes = [4, 288], strides = [1, 1]} : vector<4x342xf32> to vector<4x288xf32>
    %c7 = arith.constant 7 : index
    %c0_23 = arith.constant 0 : index
    %c0_24 = arith.constant 0 : index
    %37 = vector.load %arg2[%c7, %c0_23, %c0_24] : memref<9x4x4xf32, #tpu.memory_space<vmem>>, vector<1x4x4xf32>
    %38 = vector.shape_cast %37 : vector<1x4x4xf32> to vector<4x4xf32>
    %cst_25 = arith.constant dense<0.000000e+00> : vector<4x288xf32>
    %39 = tpu.matmul %38, %36, %cst_25 {dimension_numbers = #tpu.dot_dimension_numbers<[1], [0], [0], [1], [0, 0, 1, 1], [], []>} : vector<4x4xf32>, vector<4x288xf32>, vector<4x288xf32> -> vector<4x288xf32>
    %40 = arith.addf %35, %39 : vector<4x288xf32>
    %41 = vector.extract_strided_slice %1 {offsets = [0, 38], sizes = [4, 288], strides = [1, 1]} : vector<4x342xf32> to vector<4x288xf32>
    %c8 = arith.constant 8 : index
    %c0_26 = arith.constant 0 : index
    %c0_27 = arith.constant 0 : index
    %42 = vector.load %arg2[%c8, %c0_26, %c0_27] : memref<9x4x4xf32, #tpu.memory_space<vmem>>, vector<1x4x4xf32>
    %43 = vector.shape_cast %42 : vector<1x4x4xf32> to vector<4x4xf32>
    %cst_28 = arith.constant dense<0.000000e+00> : vector<4x288xf32>
    %44 = tpu.matmul %43, %41, %cst_28 {dimension_numbers = #tpu.dot_dimension_numbers<[1], [0], [0], [1], [0, 0, 1, 1], [], []>} : vector<4x4xf32>, vector<4x288xf32>, vector<4x288xf32> -> vector<4x288xf32>
    %45 = arith.addf %40, %44 : vector<4x288xf32>
    %c0_29 = arith.constant 0 : index
    %c0_30 = arith.constant 0 : index
    %46 = vector.load %arg3[%c0_29, %c0_30] : memref<4x1xf32, #tpu.memory_space<vmem>>, vector<4x1xf32>
    %47 = vector.broadcast %46 : vector<4x1xf32> to vector<4x288xf32>
    %48 = arith.addf %45, %47 : vector<4x288xf32>
    %cst_31 = arith.constant 0.000000e+00 : f32
    %49 = vector.broadcast %cst_31 : f32 to vector<4x288xf32>
    %50 = arith.cmpf oge, %48, %49 : vector<4x288xf32>
    %cst_32 = arith.constant 0.00999999977 : f32
    %51 = vector.broadcast %cst_32 : f32 to vector<4x288xf32>
    %52 = arith.mulf %51, %48 : vector<4x288xf32>
    %53 = arith.select %50, %48, %52 : vector<4x288xi1>, vector<4x288xf32>
    %c0_33 = arith.constant 0 : index
    %c0_34 = arith.constant 0 : index
    %c0_35 = arith.constant 0 : index
    %54 = vector.load %arg4[%c0_33, %c0_34, %c0_35] : memref<1x4x288xf32, #tpu.memory_space<vmem>>, vector<1x4x288xf32>
    %55 = vector.shape_cast %54 : vector<1x4x288xf32> to vector<4x288xf32>
    %56 = vector.shape_cast %53 : vector<4x288xf32> to vector<1x4x288xf32>
    tpu.vector_store %arg4[%c0_33, %c0_34, %c0_35], %56 {strides = array<i32>} : memref<1x4x288xf32, #tpu.memory_space<vmem>>, vector<1x4x288xf32>,
    return
  }
  func.func @transform_0(%arg0: i32) -> (i32, i32, i32) {
    %c0_i32 = arith.constant 0 : i32
    %c0_i32_0 = arith.constant 0 : i32
    %c0_i32_1 = arith.constant 0 : i32
    return %arg0, %c0_i32, %c0_i32_0 : i32, i32, i32
  }
  func.func @transform_1(%arg0: i32) -> (i32, i32, i32) {
    %c0_i32 = arith.constant 0 : i32
    %c0_i32_0 = arith.constant 0 : i32
    %c0_i32_1 = arith.constant 0 : i32
    %c0_i32_2 = arith.constant 0 : i32
    return %c0_i32, %c0_i32_0, %c0_i32_1 : i32, i32, i32
  }
  func.func @transform_2(%arg0: i32) -> (i32, i32) {
    %c0_i32 = arith.constant 0 : i32
    %c0_i32_0 = arith.constant 0 : i32
    %c0_i32_1 = arith.constant 0 : i32
    return %c0_i32, %c0_i32_0 : i32, i32
  }
  func.func @transform_3(%arg0: i32) -> (i32, i32, i32) {
    %c0_i32 = arith.constant 0 : i32
    %c0_i32_0 = arith.constant 0 : i32
    %c0_i32_1 = arith.constant 0 : i32
    return %arg0, %c0_i32, %c0_i32_0 : i32, i32, i32
  }
}

</mosaic_0001>

<llo_original>
// kernel: tpu_custom_call.1
$region0: #{tpu_custom_call.1}
  #allocation0 [shape = 'u32[]', space=smem, size = 0x4, offset = 0x4, fixed_abs, tag = 'smem constant byte address 0x4 - core index']
  #allocation1 [shape = 'u32[144,128]{1,0:T(1,128)}', space=vmem, size = 0x12000, scoped, tag = 'internal scratch']
  %s0 = inlined_call_operand.vmem [shape: f32[2,4,342], index: 0, kind: input, shape index: {}]
  %s1 = inlined_call_operand.vmem [shape: f32[9,4,4], index: 1, kind: input, shape index: {}]
  %s2 = inlined_call_operand.vmem [shape: f32[4,1], index: 2, kind: input, shape index: {}]
  %s3 = inlined_call_operand.hbm [shape: f32[2,4,288], index: 3, kind: output, shape index: {}]
  %s4 = sld [smem:[#allocation0]]
  $region45: #{tpu_custom_call.1} parent=0
    _
  %s6 = ssub.s32 1, %s4
  %s7 = scalar_select 0, %s6, %s4
  $region1: #{tpu_custom_call.1} parent=0
    #allocation2 [shape = 'u8[12288]{0}', space=vmem, size = 0x3000, scoped, tag = 'output window, operand 0']
    #allocation3 [shape = 's32[2]{0}', space=sflag, size = 0x8, scoped, tag = 'scoped memory for tpu_custom_call.1']
    %8 = vsyncpa [#allocation3], 0
    %s9 = scalar_lea.sflag [#allocation3], 1
    %10 = vsyncpa %s9, 0
    loop: start=0, step=1, limit=4
    $region2: #{tpu_custom_call.1} parent=1 // loop_pre_header
      _
    $region3: #{tpu_custom_call.1} parent=1 // loop_header
      %s12 = sphi 0, %s16
      %p13 = scmp.ge.s32.totalorder %s12, 4
      %s22 = sphi 0, %s24
      %s25 = sphi 0, %s22
      %s26 = sphi 0, %s25
      %s42 = sphi 0, %s26
      %s46 = sphi 0, %s46
      %s48 = sphi 0, %s46
      %s49 = sphi 0, %s48
      %s63 = sphi 0, %s49
      %s67 = sphi 0, %s67
      %s69 = sphi 0, %s67
      %s70 = sphi 0, %s69
      %s84 = sphi 0, %s70
      %s90 = sphi 0, %s92
      %s93 = sphi 0, %s90
      %s94 = sphi 0, %s93
      %s110 = sphi 0, %s94
    $region4: #{tpu_custom_call.1} parent=1 // loop_header_branch
      %15 = sbr.rel (%p13) target = $region8
    $region5: #{tpu_custom_call.1} parent=1 // loop_body
      %s17 = ssub.s32 %s12, 1
      %s18 = ssub.s32 %s12, 2
      %s19 = sadd.s32 %s12, 1
      %s20 = ssub.s32 %s12, %s19
      %p21 = scmp.eq.s32.totalorder %s20, 0
      %s23 = sadd.s32 %s22, 1
      %s24 = scalar_select %p21, %s22, %s23
      %p27 = pneg %p21
      %p28 = scmp.eq.s32.totalorder %s12, 1
      %p29 = por %p27, %p28
      %p30 = scmp.ne.s32.totalorder %s22, %s25
      %p31 = scmp.eq.s32.totalorder %s12, 0
      %p32 = por %p30, %p31
      %p33 = scmp.ne.s32.totalorder %s22, %s25
      %p34 = scmp.eq.s32.totalorder %s17, 1
      %p35 = por %p33, %p34
      %p36 = scmp.ne.s32.totalorder %s25, %s26
      %p37 = scmp.eq.s32.totalorder %s17, 0
      %p38 = por %p36, %p37
      %p39 = scmp.ne.s32.totalorder %s25, %s26
      %p40 = scmp.eq.s32.totalorder %s18, 1
      %p41 = por %p39, %p40
      %p43 = scmp.ne.s32.totalorder %s26, %s42
      %p44 = scmp.eq.s32.totalorder %s18, 0
      %p45 = por %p43, %p44
      %s47 = sadd.s32 %s46, 1
      %p50 = scmp.eq.s32.totalorder %s12, 1
      %p51 = scmp.ne.s32.totalorder %s46, %s48
      %p52 = scmp.eq.s32.totalorder %s12, 0
      %p53 = por %p51, %p52
      %p54 = scmp.ne.s32.totalorder %s46, %s48
      %p55 = scmp.eq.s32.totalorder %s17, 1
      %p56 = por %p54, %p55
      %p57 = scmp.ne.s32.totalorder %s48, %s49
      %p58 = scmp.eq.s32.totalorder %s17, 0
      %p59 = por %p57, %p58
      %p60 = scmp.ne.s32.totalorder %s48, %s49
      %p61 = scmp.eq.s32.totalorder %s18, 1
      %p62 = por %p60, %p61
      %p64 = scmp.ne.s32.totalorder %s49, %s63
      %p65 = scmp.eq.s32.totalorder %s18, 0
      %p66 = por %p64, %p65
      %s68 = sadd.s32 %s67, 1
      %p71 = scmp.eq.s32.totalorder %s12, 1
      %p72 = scmp.ne.s32.totalorder %s67, %s69
      %p73 = scmp.eq.s32.totalorder %s12, 0
      %p74 = por %p72, %p73
      %p75 = scmp.ne.s32.totalorder %s67, %s69
      %p76 = scmp.eq.s32.totalorder %s17, 1
      %p77 = por %p75, %p76
      %p78 = scmp.ne.s32.totalorder %s69, %s70
      %p79 = scmp.eq.s32.totalorder %s17, 0
      %p80 = por %p78, %p79
      %p81 = scmp.ne.s32.totalorder %s69, %s70
      %p82 = scmp.eq.s32.totalorder %s18, 1
      %p83 = por %p81, %p82
      %p85 = scmp.ne.s32.totalorder %s70, %s84
      %p86 = scmp.eq.s32.totalorder %s18, 0
      %p87 = por %p85, %p86
      %s88 = ssub.s32 %s12, %s19
      %p89 = scmp.eq.s32.totalorder %s88, 0
      %s91 = sadd.s32 %s90, 1
      %s92 = scalar_select %p89, %s90, %s91
      %p95 = pneg %p89
      %p96 = scmp.eq.s32.totalorder %s12, 1
      %p97 = por %p95, %p96
      %p98 = scmp.ne.s32.totalorder %s90, %s93
      %p99 = scmp.eq.s32.totalorder %s12, 0
      %p100 = por %p98, %p99
      %p101 = scmp.ne.s32.totalorder %s90, %s93
      %p102 = scmp.eq.s32.totalorder %s17, 1
      %p103 = por %p101, %p102
      %p104 = scmp.ne.s32.totalorder %s93, %s94
      %p105 = scmp.eq.s32.totalorder %s17, 0
      %p106 = por %p104, %p105
      %p107 = scmp.ne.s32.totalorder %s93, %s94
      %p108 = scmp.eq.s32.totalorder %s18, 1
      %p109 = por %p107, %p108
      %p111 = scmp.ne.s32.totalorder %s94, %s110
      %p112 = scmp.eq.s32.totalorder %s18, 0
      %p113 = por %p111, %p112
      %p114 = scmp.le.s32.totalorder 1, %s12
      %p115 = scmp.lt.s32.totalorder %s12, 3
      %p116 = pnand %p114, %p115
      %p117 = pneg %p116
      // Predicated region
      $region9: #{tpu_custom_call.1} parent=5 // pred_check
        _
      $region10: #{tpu_custom_call.1} parent=5 // pred_check_branch
        %119 = sbr.rel (%p116) target = $region12
      $region11: #{tpu_custom_call.1} parent=5 // pred_region
        %s120 = ssub.s32 %s12, 1
        // Predicated region
        $region13: #{tpu_custom_call.1} parent=11 // pred_check
          %p121 = pneg %p59
        $region14: #{tpu_custom_call.1} parent=11 // pred_check_branch
          %123 = sbr.rel (%p121) target = $region16
        $region15: #{tpu_custom_call.1} parent=11 // pred_region
          _
        $region16: #{tpu_custom_call.1} parent=11 // pred_fallthru
          _
        // Predicated region
        $region17: #{tpu_custom_call.1} parent=11 // pred_check
          %p124 = pneg %p80
        $region18: #{tpu_custom_call.1} parent=11 // pred_check_branch
          %126 = sbr.rel (%p124) target = $region20
        $region19: #{tpu_custom_call.1} parent=11 // pred_region
          _
        $region20: #{tpu_custom_call.1} parent=11 // pred_fallthru
          _
      $region12: #{tpu_custom_call.1} parent=5 // pred_fallthru
        _
      %p127 = scmp.lt.s32.totalorder %s12, 2
      // Predicated region
      $region21: #{tpu_custom_call.1} parent=5 // pred_check
        %p128 = pneg %p127
      $region22: #{tpu_custom_call.1} parent=5 // pred_check_branch
        %130 = sbr.rel (%p128) target = $region24
      $region23: #{tpu_custom_call.1} parent=5 // pred_region
        // Predicated region
        $region25: #{tpu_custom_call.1} parent=23 // pred_check
          %p131 = pneg %p32
        $region26: #{tpu_custom_call.1} parent=23 // pred_check_branch
          %133 = sbr.rel (%p131) target = $region28
        $region27: #{tpu_custom_call.1} parent=23 // pred_region
          %p134 = scmp.lt.s32.totalorder %s12, 1
          %s135 = scalar_select %p134, %s12, 1
          %s136 = smul.addr %s135, 3
          %s137 = smul.addr %s136, 4
          %s138 = scalar_lea.vmem %s0, %s137
        $region28: #{tpu_custom_call.1} parent=23 // pred_fallthru
          _
      $region24: #{tpu_custom_call.1} parent=5 // pred_fallthru
        _
      %p139 = scmp.le.s32.totalorder 1, %s12
      %p140 = scmp.lt.s32.totalorder %s12, 3
      %p141 = pnand %p139, %p140
      %p142 = pneg %p141
      // Predicated region
      $region29: #{tpu_custom_call.1} parent=5 // pred_check
        _
      $region30: #{tpu_custom_call.1} parent=5 // pred_check_branch
        %144 = sbr.rel (%p141) target = $region32
      $region31: #{tpu_custom_call.1} parent=5 // pred_region
        %s145 = ssub.s32 %s12, 1
        %p146 = scmp.lt.s32.totalorder %s17, 1
        %s147 = scalar_select %p146, %s17, 1
        %s148 = smul.addr %s147, 3
        %s149 = smul.addr %s148, 4
        %s150 = scalar_lea.vmem %s0, %s149
        %p151 = pneg %p38
        %p152 = pneg %p35
        %p153 = pneg %p59
        %p154 = pneg %p56
        %p155 = pneg %p80
        %p156 = pneg %p77
        %p157 = pneg %p106
        %p158 = pneg %p103
        %s159 = sand.u32 %s93, 1
        %s160 = scalar_lea.sflag [#allocation3], %s159
        %s161 = sand.u32 %s93, 1
        %s162 = smul.addr %s161, 12
        %s163 = scalar_lea.vmem [#allocation2], %s162
        %p164 = scmp.lt.s32.totalorder %s17, 1
        %s165 = scalar_select %p164, %s17, 1
        %s166 = smul.addr %s165, 3
        %s167 = smul.addr %s166, 4
        %s168 = scalar_lea.vmem %s0, %s167
        %v169 = vld [vmem:[%s168] sm:$0xff]
        %v170 = vld [vmem:[%s168 + $0x8] sm:$0xf]
        %v171 = vld [vmem:[%s1] sm:$0xf]
        %s172 = scalar_lea.vmem %s1, 4
        %v173 = vld [vmem:[%s172] sm:$0xf]
        %v176 = vcombine.high %v169, %v169
        %177 = vrot.lane.b32.xlu0 %v169, 127
        %v178 = vpop.permute.xlu0 %177
        %179 = vrot.lane.b32.xlu0 %v176, 127
        %v180 = vpop.permute.xlu0 %179
        %181 = vrot.lane.b32.xlu0 %v170, 127
        %v182 = vpop.permute.xlu0 %181
        %vm183 = vcmask 1039360
        %v184 = vsel %vm183, %v178, %v180
        %v185 = vsel %vm183, %v180, %v182
        %vm186 = vcmask 31744
        %v188 = vsel %vm186, %v173, 0
        %vm190 = vcmask 1043456
        %v191 = vsel %vm190, %v184, 0
        %v193 = vsel %vm190, %v185, 0
        %v195 = vsel %vm190, %v182, 0
        %197 = vmatprep.subr.mxu0 0.0
        %198 = vmatpush1.msra.mxu0 0.0
        %199 = vmatprep.subr.mxu0 0.0
        %200 = vmatpush1.msra.mxu0 0.0
        %201 = vmatprep.subr.mxu0 0.0
        %202 = vmatpush1.msra.mxu0 0.0
        %203 = vmatprep.subr.mxu0 0.0
        %204 = vmatpush1.msra.mxu0 0.0
        %205 = vmatprep.subr.mxu0 0.0
        %206 = vmatpush1.msra.mxu0 0.0
        %207 = vmatprep.subr.mxu0 0.0
        %208 = vmatpush1.msra.mxu0 0.0
        %209 = vmatprep.subr.mxu0 0.0
        %210 = vmatpush1.msra.mxu0 0.0
        %211 = vmatprep.subr.mxu0 0.0
        %212 = vmatpush1.msra.mxu0 0.0
        %213 = vmatprep.subr.mxu0 0.0
        %214 = vmatpush1.msra.mxu0 0.0
        %215 = vmatprep.subr.mxu0 0.0
        %216 = vmatpush1.msra.mxu0 0.0
        %217 = vmatprep.subr.mxu0 0.0
        %218 = vmatpush1.msra.mxu0 0.0
        %219 = vmatprep.subr.mxu0 0.0
        %220 = vmatpush1.msra.mxu0 0.0
        %221 = vmatprep.subr.mxu0 0.0
        %222 = vmatpush1.msra.mxu0 0.0
        %223 = vmatprep.subr.mxu0 0.0
        %224 = vmatpush1.msra.mxu0 0.0
        %225 = vmatprep.subr.mxu0 0.0
        %226 = vmatpush1.msra.mxu0 0.0
        %227 = vmatprep.subr.mxu0 %v193
        %228 = vmatpush1.msra.mxu0 %v191
        %229 = vmatprep.subr.mxu0 0.0
        %230 = vmatpush2.msra.mxu0 0.0
        %231 = vmatprep.subr.mxu0 0.0
        %232 = vmatpush2.msra.mxu0 0.0
        %233 = vmatprep.subr.mxu0 0.0
        %234 = vmatpush2.msra.mxu0 0.0
        %235 = vmatprep.subr.mxu0 0.0
        %236 = vmatpush2.msra.mxu0 0.0
        %237 = vmatprep.subr.mxu0 0.0
        %238 = vmatpush2.msra.mxu0 0.0
        %239 = vmatprep.subr.mxu0 0.0
        %240 = vmatpush2.msra.mxu0 0.0
        %241 = vmatprep.subr.mxu0 0.0
        %242 = vmatpush2.msra.mxu0 0.0
        %243 = vmatprep.subr.mxu0 0.0
        %244 = vmatpush2.msra.mxu0 0.0
        %245 = vmatprep.subr.mxu0 0.0
        %246 = vmatpush2.msra.mxu0 0.0
        %247 = vmatprep.subr.mxu0 0.0
        %248 = vmatpush2.msra.mxu0 0.0
        %249 = vmatprep.subr.mxu0 0.0
        %250 = vmatpush2.msra.mxu0 0.0
        %251 = vmatprep.subr.mxu0 0.0
        %252 = vmatpush2.msra.mxu0 0.0
        %253 = vmatprep.subr.mxu0 0.0
        %254 = vmatpush2.msra.mxu0 0.0
        %255 = vmatprep.subr.mxu0 0.0
        %256 = vmatpush2.msra.mxu0 0.0
        %257 = vmatprep.subr.mxu0 0.0
        %258 = vmatpush2.msra.mxu0 0.0
        %259 = vmatprep.subr.mxu0 0.0
        %260 = vmatpush2.msra.mxu0 0.0
        %261 = vmatprep.mubr.f32.mxu0 0.0
        %262 = vmatmul.mubr.f32.gmra.mxu0 %v188
        %v263 = vpop.f32.mrf.mxu0
        %v264 = vadd.f32 0.0, %v263
        %v265 = vpop.f32.mrf.mxu0
        %v266 = vadd.f32 0.0, %v265
        %267 = vdwg.mxu0
        %268 = vmatprep.subr.mxu0 0.0
        %269 = vmatpush1.msra.mxu0 0.0
        %270 = vmatprep.subr.mxu0 0.0
        %271 = vmatpush1.msra.mxu0 0.0
        %272 = vmatprep.subr.mxu0 0.0
        %273 = vmatpush1.msra.mxu0 0.0
        %274 = vmatprep.subr.mxu0 0.0
        %275 = vmatpush1.msra.mxu0 0.0
        %276 = vmatprep.subr.mxu0 0.0
        %277 = vmatpush1.msra.mxu0 0.0
        %278 = vmatprep.subr.mxu0 0.0
        %279 = vmatpush1.msra.mxu0 0.0
        %280 = vmatprep.subr.mxu0 0.0
        %281 = vmatpush1.msra.mxu0 0.0
        %282 = vmatprep.subr.mxu0 0.0
        %283 = vmatpush1.msra.mxu0 0.0
        %284 = vmatprep.subr.mxu0 0.0
        %285 = vmatpush1.msra.mxu0 0.0
        %286 = vmatprep.subr.mxu0 0.0
        %287 = vmatpush1.msra.mxu0 0.0
        %288 = vmatprep.subr.mxu0 0.0
        %289 = vmatpush1.msra.mxu0 0.0
        %290 = vmatprep.subr.mxu0 0.0
        %291 = vmatpush1.msra.mxu0 0.0
        %292 = vmatprep.subr.mxu0 0.0
        %293 = vmatpush1.msra.mxu0 0.0
        %294 = vmatprep.subr.mxu0 0.0
        %295 = vmatpush1.msra.mxu0 0.0
        %296 = vmatprep.subr.mxu0 0.0
        %297 = vmatpush1.msra.mxu0 0.0
        %298 = vmatprep.subr.mxu0 0.0
        %299 = vmatpush1.msra.mxu0 %v195
        %300 = vmatprep.subr.mxu0 0.0
        %301 = vmatpush2.msra.mxu0 0.0
        %302 = vmatprep.subr.mxu0 0.0
        %303 = vmatpush2.msra.mxu0 0.0
        %304 = vmatprep.subr.mxu0 0.0
        %305 = vmatpush2.msra.mxu0 0.0
        %306 = vmatprep.subr.mxu0 0.0
        %307 = vmatpush2.msra.mxu0 0.0
        %308 = vmatprep.subr.mxu0 0.0
        %309 = vmatpush2.msra.mxu0 0.0
        %310 = vmatprep.subr.mxu0 0.0
        %311 = vmatpush2.msra.mxu0 0.0
        %312 = vmatprep.subr.mxu0 0.0
        %313 = vmatpush2.msra.mxu0 0.0
        %314 = vmatprep.subr.mxu0 0.0
        %315 = vmatpush2.msra.mxu0 0.0
        %316 = vmatprep.subr.mxu0 0.0
        %317 = vmatpush2.msra.mxu0 0.0
        %318 = vmatprep.subr.mxu0 0.0
        %319 = vmatpush2.msra.mxu0 0.0
        %320 = vmatprep.subr.mxu0 0.0
        %321 = vmatpush2.msra.mxu0 0.0
        %322 = vmatprep.subr.mxu0 0.0
        %323 = vmatpush2.msra.mxu0 0.0
        %324 = vmatprep.subr.mxu0 0.0
        %325 = vmatpush2.msra.mxu0 0.0
        %326 = vmatprep.subr.mxu0 0.0
        %327 = vmatpush2.msra.mxu0 0.0
        %328 = vmatprep.subr.mxu0 0.0
        %329 = vmatpush2.msra.mxu0 0.0
        %330 = vmatprep.subr.mxu0 0.0
        %331 = vmatpush2.msra.mxu0 0.0
        %332 = vmatprep.mubr.f32.mxu0 0.0
        %333 = vmatmul.mubr.f32.gmra.mxu0 %v188
        %v334 = vpop.f32.mrf.mxu0
        %v335 = vadd.f32 0.0, %v334
        %v336 = vpop.f32.mrf.mxu0
        %337 = vdwg.mxu0
        %v339 = vsel %vm186, %v171, 0
        %v341 = vsel %vm190, %v169, 0
        %v343 = vsel %vm190, %v176, 0
        %v345 = vsel %vm190, %v170, 0
        %347 = vmatprep.subr.mxu0 0.0
        %348 = vmatpush1.msra.mxu0 0.0
        %349 = vmatprep.subr.mxu0 0.0
        %350 = vmatpush1.msra.mxu0 0.0
        %351 = vmatprep.subr.mxu0 0.0
        %352 = vmatpush1.msra.mxu0 0.0
        %353 = vmatprep.subr.mxu0 0.0
        %354 = vmatpush1.msra.mxu0 0.0
        %355 = vmatprep.subr.mxu0 0.0
        %356 = vmatpush1.msra.mxu0 0.0
        %357 = vmatprep.subr.mxu0 0.0
        %358 = vmatpush1.msra.mxu0 0.0
        %359 = vmatprep.subr.mxu0 0.0
        %360 = vmatpush1.msra.mxu0 0.0
        %361 = vmatprep.subr.mxu0 0.0
        %362 = vmatpush1.msra.mxu0 0.0
        %363 = vmatprep.subr.mxu0 0.0
        %364 = vmatpush1.msra.mxu0 0.0
        %365 = vmatprep.subr.mxu0 0.0
        %366 = vmatpush1.msra.mxu0 0.0
        %367 = vmatprep.subr.mxu0 0.0
        %368 = vmatpush1.msra.mxu0 0.0
        %369 = vmatprep.subr.mxu0 0.0
        %370 = vmatpush1.msra.mxu0 0.0
        %371 = vmatprep.subr.mxu0 0.0
        %372 = vmatpush1.msra.mxu0 0.0
        %373 = vmatprep.subr.mxu0 0.0
        %374 = vmatpush1.msra.mxu0 0.0
        %375 = vmatprep.subr.mxu0 0.0
        %376 = vmatpush1.msra.mxu0 0.0
        %377 = vmatprep.subr.mxu0 %v343
        %378 = vmatpush1.msra.mxu0 %v341
        %379 = vmatprep.subr.mxu0 0.0
        %380 = vmatpush2.msra.mxu0 0.0
        %381 = vmatprep.subr.mxu0 0.0
        %382 = vmatpush2.msra.mxu0 0.0
        %383 = vmatprep.subr.mxu0 0.0
        %384 = vmatpush2.msra.mxu0 0.0
        %385 = vmatprep.subr.mxu0 0.0
        %386 = vmatpush2.msra.mxu0 0.0
        %387 = vmatprep.subr.mxu0 0.0
        %388 = vmatpush2.msra.mxu0 0.0
        %389 = vmatprep.subr.mxu0 0.0
        %390 = vmatpush2.msra.mxu0 0.0
        %391 = vmatprep.subr.mxu0 0.0
        %392 = vmatpush2.msra.mxu0 0.0
        %393 = vmatprep.subr.mxu0 0.0
        %394 = vmatpush2.msra.mxu0 0.0
        %395 = vmatprep.subr.mxu0 0.0
        %396 = vmatpush2.msra.mxu0 0.0
        %397 = vmatprep.subr.mxu0 0.0
        %398 = vmatpush2.msra.mxu0 0.0
        %399 = vmatprep.subr.mxu0 0.0
        %400 = vmatpush2.msra.mxu0 0.0
        %401 = vmatprep.subr.mxu0 0.0
        %402 = vmatpush2.msra.mxu0 0.0
        %403 = vmatprep.subr.mxu0 0.0
        %404 = vmatpush2.msra.mxu0 0.0
        %405 = vmatprep.subr.mxu0 0.0
        %406 = vmatpush2.msra.mxu0 0.0
        %407 = vmatprep.subr.mxu0 0.0
        %408 = vmatpush2.msra.mxu0 0.0
        %409 = vmatprep.subr.mxu0 0.0
        %410 = vmatpush2.msra.mxu0 0.0
        %411 = vmatprep.mubr.f32.mxu0 0.0
        %412 = vmatmul.mubr.f32.gmra.mxu0 %v339
        %v413 = vpop.f32.mrf.mxu0
        %v414 = vadd.f32 %v264, %v413
        %v415 = vpop.f32.mrf.mxu0
        %v416 = vadd.f32 %v266, %v415
        %417 = vdwg.mxu0
        %418 = vmatprep.subr.mxu0 0.0
        %419 = vmatpush1.msra.mxu0 0.0
        %420 = vmatprep.subr.mxu0 0.0
        %421 = vmatpush1.msra.mxu0 0.0
        %422 = vmatprep.subr.mxu0 0.0
        %423 = vmatpush1.msra.mxu0 0.0
        %424 = vmatprep.subr.mxu0 0.0
        %425 = vmatpush1.msra.mxu0 0.0
        %426 = vmatprep.subr.mxu0 0.0
        %427 = vmatpush1.msra.mxu0 0.0
        %428 = vmatprep.subr.mxu0 0.0
        %429 = vmatpush1.msra.mxu0 0.0
        %430 = vmatprep.subr.mxu0 0.0
        %431 = vmatpush1.msra.mxu0 0.0
        %432 = vmatprep.subr.mxu0 0.0
        %433 = vmatpush1.msra.mxu0 0.0
        %434 = vmatprep.subr.mxu0 0.0
        %435 = vmatpush1.msra.mxu0 0.0
        %436 = vmatprep.subr.mxu0 0.0
        %437 = vmatpush1.msra.mxu0 0.0
        %438 = vmatprep.subr.mxu0 0.0
        %439 = vmatpush1.msra.mxu0 0.0
        %440 = vmatprep.subr.mxu0 0.0
        %441 = vmatpush1.msra.mxu0 0.0
        %442 = vmatprep.subr.mxu0 0.0
        %443 = vmatpush1.msra.mxu0 0.0
        %444 = vmatprep.subr.mxu0 0.0
        %445 = vmatpush1.msra.mxu0 0.0
        %446 = vmatprep.subr.mxu0 0.0
        %447 = vmatpush1.msra.mxu0 0.0
        %448 = vmatprep.subr.mxu0 0.0
        %449 = vmatpush1.msra.mxu0 %v345
        %450 = vmatprep.subr.mxu0 0.0
        %451 = vmatpush2.msra.mxu0 0.0
        %452 = vmatprep.subr.mxu0 0.0
        %453 = vmatpush2.msra.mxu0 0.0
        %454 = vmatprep.subr.mxu0 0.0
        %455 = vmatpush2.msra.mxu0 0.0
        %456 = vmatprep.subr.mxu0 0.0
        %457 = vmatpush2.msra.mxu0 0.0
        %458 = vmatprep.subr.mxu0 0.0
        %459 = vmatpush2.msra.mxu0 0.0
        %460 = vmatprep.subr.mxu0 0.0
        %461 = vmatpush2.msra.mxu0 0.0
        %462 = vmatprep.subr.mxu0 0.0
        %463 = vmatpush2.msra.mxu0 0.0
        %464 = vmatprep.subr.mxu0 0.0
        %465 = vmatpush2.msra.mxu0 0.0
        %466 = vmatprep.subr.mxu0 0.0
        %467 = vmatpush2.msra.mxu0 0.0
        %468 = vmatprep.subr.mxu0 0.0
        %469 = vmatpush2.msra.mxu0 0.0
        %470 = vmatprep.subr.mxu0 0.0
        %471 = vmatpush2.msra.mxu0 0.0
        %472 = vmatprep.subr.mxu0 0.0
        %473 = vmatpush2.msra.mxu0 0.0
        %474 = vmatprep.subr.mxu0 0.0
        %475 = vmatpush2.msra.mxu0 0.0
        %476 = vmatprep.subr.mxu0 0.0
        %477 = vmatpush2.msra.mxu0 0.0
        %478 = vmatprep.subr.mxu0 0.0
        %479 = vmatpush2.msra.mxu0 0.0
        %480 = vmatprep.subr.mxu0 0.0
        %481 = vmatpush2.msra.mxu0 0.0
        %482 = vmatprep.mubr.f32.mxu0 0.0
        %483 = vmatmul.mubr.f32.gmra.mxu0 %v339
        %v484 = vpop.f32.mrf.mxu0
        %v485 = vadd.f32 %v335, %v484
        %v486 = vpop.f32.mrf.mxu0
        %487 = vdwg.mxu0
        %s488 = scalar_lea.vmem %s1, 8
        %v489 = vld [vmem:[%s488] sm:$0xf]
        %490 = vrot.lane.b32.xlu0 %v169, 126
        %v491 = vpop.permute.xlu0 %490
        %492 = vrot.lane.b32.xlu0 %v176, 126
        %v493 = vpop.permute.xlu0 %492
        %494 = vrot.lane.b32.xlu0 %v170, 126
        %v495 = vpop.permute.xlu0 %494
        %vm496 = vcmask 1031168
        %v497 = vsel %vm496, %v491, %v493
        %v498 = vsel %vm496, %v493, %v495
        %v500 = vsel %vm186, %v489, 0
        %v502 = vsel %vm190, %v497, 0
        %v504 = vsel %vm190, %v498, 0
        %v506 = vsel %vm190, %v495, 0
        %508 = vmatprep.subr.mxu0 0.0
        %509 = vmatpush1.msra.mxu0 0.0
        %510 = vmatprep.subr.mxu0 0.0
        %511 = vmatpush1.msra.mxu0 0.0
        %512 = vmatprep.subr.mxu0 0.0
        %513 = vmatpush1.msra.mxu0 0.0
        %514 = vmatprep.subr.mxu0 0.0
        %515 = vmatpush1.msra.mxu0 0.0
        %516 = vmatprep.subr.mxu0 0.0
        %517 = vmatpush1.msra.mxu0 0.0
        %518 = vmatprep.subr.mxu0 0.0
        %519 = vmatpush1.msra.mxu0 0.0
        %520 = vmatprep.subr.mxu0 0.0
        %521 = vmatpush1.msra.mxu0 0.0
        %522 = vmatprep.subr.mxu0 0.0
        %523 = vmatpush1.msra.mxu0 0.0
        %524 = vmatprep.subr.mxu0 0.0
        %525 = vmatpush1.msra.mxu0 0.0
        %526 = vmatprep.subr.mxu0 0.0
        %527 = vmatpush1.msra.mxu0 0.0
        %528 = vmatprep.subr.mxu0 0.0
        %529 = vmatpush1.msra.mxu0 0.0
        %530 = vmatprep.subr.mxu0 0.0
        %531 = vmatpush1.msra.mxu0 0.0
        %532 = vmatprep.subr.mxu0 0.0
        %533 = vmatpush1.msra.mxu0 0.0
        %534 = vmatprep.subr.mxu0 0.0
        %535 = vmatpush1.msra.mxu0 0.0
        %536 = vmatprep.subr.mxu0 0.0
        %537 = vmatpush1.msra.mxu0 0.0
        %538 = vmatprep.subr.mxu0 %v504
        %539 = vmatpush1.msra.mxu0 %v502
        %540 = vmatprep.subr.mxu0 0.0
        %541 = vmatpush2.msra.mxu0 0.0
        %542 = vmatprep.subr.mxu0 0.0
        %543 = vmatpush2.msra.mxu0 0.0
        %544 = vmatprep.subr.mxu0 0.0
        %545 = vmatpush2.msra.mxu0 0.0
        %546 = vmatprep.subr.mxu0 0.0
        %547 = vmatpush2.msra.mxu0 0.0
        %548 = vmatprep.subr.mxu0 0.0
        %549 = vmatpush2.msra.mxu0 0.0
        %550 = vmatprep.subr.mxu0 0.0
        %551 = vmatpush2.msra.mxu0 0.0
        %552 = vmatprep.subr.mxu0 0.0
        %553 = vmatpush2.msra.mxu0 0.0
        %554 = vmatprep.subr.mxu0 0.0
        %555 = vmatpush2.msra.mxu0 0.0
        %556 = vmatprep.subr.mxu0 0.0
        %557 = vmatpush2.msra.mxu0 0.0
        %558 = vmatprep.subr.mxu0 0.0
        %559 = vmatpush2.msra.mxu0 0.0
        %560 = vmatprep.subr.mxu0 0.0
        %561 = vmatpush2.msra.mxu0 0.0
        %562 = vmatprep.subr.mxu0 0.0
        %563 = vmatpush2.msra.mxu0 0.0
        %564 = vmatprep.subr.mxu0 0.0
        %565 = vmatpush2.msra.mxu0 0.0
        %566 = vmatprep.subr.mxu0 0.0
        %567 = vmatpush2.msra.mxu0 0.0
        %568 = vmatprep.subr.mxu0 0.0
        %569 = vmatpush2.msra.mxu0 0.0
        %570 = vmatprep.subr.mxu0 0.0
        %571 = vmatpush2.msra.mxu0 0.0
        %572 = vmatprep.mubr.f32.mxu0 0.0
        %573 = vmatmul.mubr.f32.gmra.mxu0 %v500
        %v574 = vpop.f32.mrf.mxu0
        %v575 = vadd.f32 0.0, %v574
        %v576 = vpop.f32.mrf.mxu0
        %v577 = vadd.f32 0.0, %v576
        %578 = vdwg.mxu0
        %579 = vmatprep.subr.mxu0 0.0
        %580 = vmatpush1.msra.mxu0 0.0
        %581 = vmatprep.subr.mxu0 0.0
        %582 = vmatpush1.msra.mxu0 0.0
        %583 = vmatprep.subr.mxu0 0.0
        %584 = vmatpush1.msra.mxu0 0.0
        %585 = vmatprep.subr.mxu0 0.0
        %586 = vmatpush1.msra.mxu0 0.0
        %587 = vmatprep.subr.mxu0 0.0
        %588 = vmatpush1.msra.mxu0 0.0
        %589 = vmatprep.subr.mxu0 0.0
        %590 = vmatpush1.msra.mxu0 0.0
        %591 = vmatprep.subr.mxu0 0.0
        %592 = vmatpush1.msra.mxu0 0.0
        %593 = vmatprep.subr.mxu0 0.0
        %594 = vmatpush1.msra.mxu0 0.0
        %595 = vmatprep.subr.mxu0 0.0
        %596 = vmatpush1.msra.mxu0 0.0
        %597 = vmatprep.subr.mxu0 0.0
        %598 = vmatpush1.msra.mxu0 0.0
        %599 = vmatprep.subr.mxu0 0.0
        %600 = vmatpush1.msra.mxu0 0.0
        %601 = vmatprep.subr.mxu0 0.0
        %602 = vmatpush1.msra.mxu0 0.0
        %603 = vmatprep.subr.mxu0 0.0
        %604 = vmatpush1.msra.mxu0 0.0
        %605 = vmatprep.subr.mxu0 0.0
        %606 = vmatpush1.msra.mxu0 0.0
        %607 = vmatprep.subr.mxu0 0.0
        %608 = vmatpush1.msra.mxu0 0.0
        %609 = vmatprep.subr.mxu0 0.0
        %610 = vmatpush1.msra.mxu0 %v506
        %611 = vmatprep.subr.mxu0 0.0
        %612 = vmatpush2.msra.mxu0 0.0
        %613 = vmatprep.subr.mxu0 0.0
        %614 = vmatpush2.msra.mxu0 0.0
        %615 = vmatprep.subr.mxu0 0.0
        %616 = vmatpush2.msra.mxu0 0.0
        %617 = vmatprep.subr.mxu0 0.0
        %618 = vmatpush2.msra.mxu0 0.0
        %619 = vmatprep.subr.mxu0 0.0
        %620 = vmatpush2.msra.mxu0 0.0
        %621 = vmatprep.subr.mxu0 0.0
        %622 = vmatpush2.msra.mxu0 0.0
        %623 = vmatprep.subr.mxu0 0.0
        %624 = vmatpush2.msra.mxu0 0.0
        %625 = vmatprep.subr.mxu0 0.0
        %626 = vmatpush2.msra.mxu0 0.0
        %627 = vmatprep.subr.mxu0 0.0
        %628 = vmatpush2.msra.mxu0 0.0
        %629 = vmatprep.subr.mxu0 0.0
        %630 = vmatpush2.msra.mxu0 0.0
        %631 = vmatprep.subr.mxu0 0.0
        %632 = vmatpush2.msra.mxu0 0.0
        %633 = vmatprep.subr.mxu0 0.0
        %634 = vmatpush2.msra.mxu0 0.0
        %635 = vmatprep.subr.mxu0 0.0
        %636 = vmatpush2.msra.mxu0 0.0
        %637 = vmatprep.subr.mxu0 0.0
        %638 = vmatpush2.msra.mxu0 0.0
        %639 = vmatprep.subr.mxu0 0.0
        %640 = vmatpush2.msra.mxu0 0.0
        %641 = vmatprep.subr.mxu0 0.0
        %642 = vmatpush2.msra.mxu0 0.0
        %643 = vmatprep.mubr.f32.mxu0 0.0
        %644 = vmatmul.mubr.f32.gmra.mxu0 %v500
        %v645 = vpop.f32.mrf.mxu0
        %v646 = vadd.f32 0.0, %v645
        %v647 = vpop.f32.mrf.mxu0
        %648 = vdwg.mxu0
        %v649 = vadd.f32 %v414, %v575
        %v650 = vadd.f32 %v416, %v577
        %v651 = vadd.f32 %v485, %v646
        %s652 = scalar_lea.vmem %s1, 12
        %v653 = vld [vmem:[%s652] sm:$0xf]
        %654 = vrot.lane.b32.xlu0 %v169, 110
        %v655 = vpop.permute.xlu0 %654
        %656 = vrot.lane.b32.xlu0 %v176, 110
        %v657 = vpop.permute.xlu0 %656
        %658 = vrot.lane.b32.xlu0 %v170, 110
        %v659 = vpop.permute.xlu0 %658
        %vm660 = vcmask 900096
        %v661 = vsel %vm660, %v655, %v657
        %v662 = vsel %vm660, %v657, %v659
        %v664 = vsel %vm186, %v653, 0
        %v666 = vsel %vm190, %v661, 0
        %v668 = vsel %vm190, %v662, 0
        %v670 = vsel %vm190, %v659, 0
        %672 = vmatprep.subr.mxu0 0.0
        %673 = vmatpush1.msra.mxu0 0.0
        %674 = vmatprep.subr.mxu0 0.0
        %675 = vmatpush1.msra.mxu0 0.0
        %676 = vmatprep.subr.mxu0 0.0
        %677 = vmatpush1.msra.mxu0 0.0
        %678 = vmatprep.subr.mxu0 0.0
        %679 = vmatpush1.msra.mxu0 0.0
        %680 = vmatprep.subr.mxu0 0.0
        %681 = vmatpush1.msra.mxu0 0.0
        %682 = vmatprep.subr.mxu0 0.0
        %683 = vmatpush1.msra.mxu0 0.0
        %684 = vmatprep.subr.mxu0 0.0
        %685 = vmatpush1.msra.mxu0 0.0
        %686 = vmatprep.subr.mxu0 0.0
        %687 = vmatpush1.msra.mxu0 0.0
        %688 = vmatprep.subr.mxu0 0.0
        %689 = vmatpush1.msra.mxu0 0.0
        %690 = vmatprep.subr.mxu0 0.0
        %691 = vmatpush1.msra.mxu0 0.0
        %692 = vmatprep.subr.mxu0 0.0
        %693 = vmatpush1.msra.mxu0 0.0
        %694 = vmatprep.subr.mxu0 0.0
        %695 = vmatpush1.msra.mxu0 0.0
        %696 = vmatprep.subr.mxu0 0.0
        %697 = vmatpush1.msra.mxu0 0.0
        %698 = vmatprep.subr.mxu0 0.0
        %699 = vmatpush1.msra.mxu0 0.0
        %700 = vmatprep.subr.mxu0 0.0
        %701 = vmatpush1.msra.mxu0 0.0
        %702 = vmatprep.subr.mxu0 %v668
        %703 = vmatpush1.msra.mxu0 %v666
        %704 = vmatprep.subr.mxu0 0.0
        %705 = vmatpush2.msra.mxu0 0.0
        %706 = vmatprep.subr.mxu0 0.0
        %707 = vmatpush2.msra.mxu0 0.0
        %708 = vmatprep.subr.mxu0 0.0
        %709 = vmatpush2.msra.mxu0 0.0
        %710 = vmatprep.subr.mxu0 0.0
        %711 = vmatpush2.msra.mxu0 0.0
        %712 = vmatprep.subr.mxu0 0.0
        %713 = vmatpush2.msra.mxu0 0.0
        %714 = vmatprep.subr.mxu0 0.0
        %715 = vmatpush2.msra.mxu0 0.0
        %716 = vmatprep.subr.mxu0 0.0
        %717 = vmatpush2.msra.mxu0 0.0
        %718 = vmatprep.subr.mxu0 0.0
        %719 = vmatpush2.msra.mxu0 0.0
        %720 = vmatprep.subr.mxu0 0.0
        %721 = vmatpush2.msra.mxu0 0.0
        %722 = vmatprep.subr.mxu0 0.0
        %723 = vmatpush2.msra.mxu0 0.0
        %724 = vmatprep.subr.mxu0 0.0
        %725 = vmatpush2.msra.mxu0 0.0
        %726 = vmatprep.subr.mxu0 0.0
        %727 = vmatpush2.msra.mxu0 0.0
        %728 = vmatprep.subr.mxu0 0.0
        %729 = vmatpush2.msra.mxu0 0.0
        %730 = vmatprep.subr.mxu0 0.0
        %731 = vmatpush2.msra.mxu0 0.0
        %732 = vmatprep.subr.mxu0 0.0
        %733 = vmatpush2.msra.mxu0 0.0
        %734 = vmatprep.subr.mxu0 0.0
        %735 = vmatpush2.msra.mxu0 0.0
        %736 = vmatprep.mubr.f32.mxu0 0.0
        %737 = vmatmul.mubr.f32.gmra.mxu0 %v664
        %v738 = vpop.f32.mrf.mxu0
        %v739 = vadd.f32 0.0, %v738
        %v740 = vpop.f32.mrf.mxu0
        %v741 = vadd.f32 0.0, %v740
        %742 = vdwg.mxu0
        %743 = vmatprep.subr.mxu0 0.0
        %744 = vmatpush1.msra.mxu0 0.0
        %745 = vmatprep.subr.mxu0 0.0
        %746 = vmatpush1.msra.mxu0 0.0
        %747 = vmatprep.subr.mxu0 0.0
        %748 = vmatpush1.msra.mxu0 0.0
        %749 = vmatprep.subr.mxu0 0.0
        %750 = vmatpush1.msra.mxu0 0.0
        %751 = vmatprep.subr.mxu0 0.0
        %752 = vmatpush1.msra.mxu0 0.0
        %753 = vmatprep.subr.mxu0 0.0
        %754 = vmatpush1.msra.mxu0 0.0
        %755 = vmatprep.subr.mxu0 0.0
        %756 = vmatpush1.msra.mxu0 0.0
        %757 = vmatprep.subr.mxu0 0.0
        %758 = vmatpush1.msra.mxu0 0.0
        %759 = vmatprep.subr.mxu0 0.0
        %760 = vmatpush1.msra.mxu0 0.0
        %761 = vmatprep.subr.mxu0 0.0
        %762 = vmatpush1.msra.mxu0 0.0
        %763 = vmatprep.subr.mxu0 0.0
        %764 = vmatpush1.msra.mxu0 0.0
        %765 = vmatprep.subr.mxu0 0.0
        %766 = vmatpush1.msra.mxu0 0.0
        %767 = vmatprep.subr.mxu0 0.0
        %768 = vmatpush1.msra.mxu0 0.0
        %769 = vmatprep.subr.mxu0 0.0
        %770 = vmatpush1.msra.mxu0 0.0
        %771 = vmatprep.subr.mxu0 0.0
        %772 = vmatpush1.msra.mxu0 0.0
        %773 = vmatprep.subr.mxu0 0.0
        %774 = vmatpush1.msra.mxu0 %v670
        %775 = vmatprep.subr.mxu0 0.0
        %776 = vmatpush2.msra.mxu0 0.0
        %777 = vmatprep.subr.mxu0 0.0
        %778 = vmatpush2.msra.mxu0 0.0
        %779 = vmatprep.subr.mxu0 0.0
        %780 = vmatpush2.msra.mxu0 0.0
        %781 = vmatprep.subr.mxu0 0.0
        %782 = vmatpush2.msra.mxu0 0.0
        %783 = vmatprep.subr.mxu0 0.0
        %784 = vmatpush2.msra.mxu0 0.0
        %785 = vmatprep.subr.mxu0 0.0
        %786 = vmatpush2.msra.mxu0 0.0
        %787 = vmatprep.subr.mxu0 0.0
        %788 = vmatpush2.msra.mxu0 0.0
        %789 = vmatprep.subr.mxu0 0.0
        %790 = vmatpush2.msra.mxu0 0.0
        %791 = vmatprep.subr.mxu0 0.0
        %792 = vmatpush2.msra.mxu0 0.0
        %793 = vmatprep.subr.mxu0 0.0
        %794 = vmatpush2.msra.mxu0 0.0
        %795 = vmatprep.subr.mxu0 0.0
        %796 = vmatpush2.msra.mxu0 0.0
        %797 = vmatprep.subr.mxu0 0.0
        %798 = vmatpush2.msra.mxu0 0.0
        %799 = vmatprep.subr.mxu0 0.0
        %800 = vmatpush2.msra.mxu0 0.0
        %801 = vmatprep.subr.mxu0 0.0
        %802 = vmatpush2.msra.mxu0 0.0
        %803 = vmatprep.subr.mxu0 0.0
        %804 = vmatpush2.msra.mxu0 0.0
        %805 = vmatprep.subr.mxu0 0.0
        %806 = vmatpush2.msra.mxu0 0.0
        %807 = vmatprep.mubr.f32.mxu0 0.0
        %808 = vmatmul.mubr.f32.gmra.mxu0 %v664
        %v809 = vpop.f32.mrf.mxu0
        %v810 = vadd.f32 0.0, %v809
        %v811 = vpop.f32.mrf.mxu0
        %812 = vdwg.mxu0
        %v813 = vadd.f32 %v649, %v739
        %v814 = vadd.f32 %v650, %v741
        %v815 = vadd.f32 %v651, %v810
        %s816 = scalar_lea.vmem %s1, 16
        %v817 = vld [vmem:[%s816] sm:$0xf]
        %818 = vrot.lane.b32.xlu0 %v169, 109
        %v819 = vpop.permute.xlu0 %818
        %820 = vrot.lane.b32.xlu0 %v176, 109
        %v821 = vpop.permute.xlu0 %820
        %822 = vrot.lane.b32.xlu0 %v170, 109
        %v823 = vpop.permute.xlu0 %822
        %vm824 = vcmask 891904
        %v825 = vsel %vm824, %v819, %v821
        %v826 = vsel %vm824, %v821, %v823
        %v828 = vsel %vm186, %v817, 0
        %v830 = vsel %vm190, %v825, 0
        %v832 = vsel %vm190, %v826, 0
        %v834 = vsel %vm190, %v823, 0
        %836 = vmatprep.subr.mxu0 0.0
        %837 = vmatpush1.msra.mxu0 0.0
        %838 = vmatprep.subr.mxu0 0.0
        %839 = vmatpush1.msra.mxu0 0.0
        %840 = vmatprep.subr.mxu0 0.0
        %841 = vmatpush1.msra.mxu0 0.0
        %842 = vmatprep.subr.mxu0 0.0
        %843 = vmatpush1.msra.mxu0 0.0
        %844 = vmatprep.subr.mxu0 0.0
        %845 = vmatpush1.msra.mxu0 0.0
        %846 = vmatprep.subr.mxu0 0.0
        %847 = vmatpush1.msra.mxu0 0.0
        %848 = vmatprep.subr.mxu0 0.0
        %849 = vmatpush1.msra.mxu0 0.0
        %850 = vmatprep.subr.mxu0 0.0
        %851 = vmatpush1.msra.mxu0 0.0
        %852 = vmatprep.subr.mxu0 0.0
        %853 = vmatpush1.msra.mxu0 0.0
        %854 = vmatprep.subr.mxu0 0.0
        %855 = vmatpush1.msra.mxu0 0.0
        %856 = vmatprep.subr.mxu0 0.0
        %857 = vmatpush1.msra.mxu0 0.0
        %858 = vmatprep.subr.mxu0 0.0
        %859 = vmatpush1.msra.mxu0 0.0
        %860 = vmatprep.subr.mxu0 0.0
        %861 = vmatpush1.msra.mxu0 0.0
        %862 = vmatprep.subr.mxu0 0.0
        %863 = vmatpush1.msra.mxu0 0.0
        %864 = vmatprep.subr.mxu0 0.0
        %865 = vmatpush1.msra.mxu0 0.0
        %866 = vmatprep.subr.mxu0 %v832
        %867 = vmatpush1.msra.mxu0 %v830
        %868 = vmatprep.subr.mxu0 0.0
        %869 = vmatpush2.msra.mxu0 0.0
        %870 = vmatprep.subr.mxu0 0.0
        %871 = vmatpush2.msra.mxu0 0.0
        %872 = vmatprep.subr.mxu0 0.0
        %873 = vmatpush2.msra.mxu0 0.0
        %874 = vmatprep.subr.mxu0 0.0
        %875 = vmatpush2.msra.mxu0 0.0
        %876 = vmatprep.subr.mxu0 0.0
        %877 = vmatpush2.msra.mxu0 0.0
        %878 = vmatprep.subr.mxu0 0.0
        %879 = vmatpush2.msra.mxu0 0.0
        %880 = vmatprep.subr.mxu0 0.0
        %881 = vmatpush2.msra.mxu0 0.0
        %882 = vmatprep.subr.mxu0 0.0
        %883 = vmatpush2.msra.mxu0 0.0
        %884 = vmatprep.subr.mxu0 0.0
        %885 = vmatpush2.msra.mxu0 0.0
        %886 = vmatprep.subr.mxu0 0.0
        %887 = vmatpush2.msra.mxu0 0.0
        %888 = vmatprep.subr.mxu0 0.0
        %889 = vmatpush2.msra.mxu0 0.0
        %890 = vmatprep.subr.mxu0 0.0
        %891 = vmatpush2.msra.mxu0 0.0
        %892 = vmatprep.subr.mxu0 0.0
        %893 = vmatpush2.msra.mxu0 0.0
        %894 = vmatprep.subr.mxu0 0.0
        %895 = vmatpush2.msra.mxu0 0.0
        %896 = vmatprep.subr.mxu0 0.0
        %897 = vmatpush2.msra.mxu0 0.0
        %898 = vmatprep.subr.mxu0 0.0
        %899 = vmatpush2.msra.mxu0 0.0
        %900 = vmatprep.mubr.f32.mxu0 0.0
        %901 = vmatmul.mubr.f32.gmra.mxu0 %v828
        %v902 = vpop.f32.mrf.mxu0
        %v903 = vadd.f32 0.0, %v902
        %v904 = vpop.f32.mrf.mxu0
        %v905 = vadd.f32 0.0, %v904
        %906 = vdwg.mxu0
        %907 = vmatprep.subr.mxu0 0.0
        %908 = vmatpush1.msra.mxu0 0.0
        %909 = vmatprep.subr.mxu0 0.0
        %910 = vmatpush1.msra.mxu0 0.0
        %911 = vmatprep.subr.mxu0 0.0
        %912 = vmatpush1.msra.mxu0 0.0
        %913 = vmatprep.subr.mxu0 0.0
        %914 = vmatpush1.msra.mxu0 0.0
        %915 = vmatprep.subr.mxu0 0.0
        %916 = vmatpush1.msra.mxu0 0.0
        %917 = vmatprep.subr.mxu0 0.0
        %918 = vmatpush1.msra.mxu0 0.0
        %919 = vmatprep.subr.mxu0 0.0
        %920 = vmatpush1.msra.mxu0 0.0
        %921 = vmatprep.subr.mxu0 0.0
        %922 = vmatpush1.msra.mxu0 0.0
        %923 = vmatprep.subr.mxu0 0.0
        %924 = vmatpush1.msra.mxu0 0.0
        %925 = vmatprep.subr.mxu0 0.0
        %926 = vmatpush1.msra.mxu0 0.0
        %927 = vmatprep.subr.mxu0 0.0
        %928 = vmatpush1.msra.mxu0 0.0
        %929 = vmatprep.subr.mxu0 0.0
        %930 = vmatpush1.msra.mxu0 0.0
        %931 = vmatprep.subr.mxu0 0.0
        %932 = vmatpush1.msra.mxu0 0.0
        %933 = vmatprep.subr.mxu0 0.0
        %934 = vmatpush1.msra.mxu0 0.0
        %935 = vmatprep.subr.mxu0 0.0
        %936 = vmatpush1.msra.mxu0 0.0
        %937 = vmatprep.subr.mxu0 0.0
        %938 = vmatpush1.msra.mxu0 %v834
        %939 = vmatprep.subr.mxu0 0.0
        %940 = vmatpush2.msra.mxu0 0.0
        %941 = vmatprep.subr.mxu0 0.0
        %942 = vmatpush2.msra.mxu0 0.0
        %943 = vmatprep.subr.mxu0 0.0
        %944 = vmatpush2.msra.mxu0 0.0
        %945 = vmatprep.subr.mxu0 0.0
        %946 = vmatpush2.msra.mxu0 0.0
        %947 = vmatprep.subr.mxu0 0.0
        %948 = vmatpush2.msra.mxu0 0.0
        %949 = vmatprep.subr.mxu0 0.0
        %950 = vmatpush2.msra.mxu0 0.0
        %951 = vmatprep.subr.mxu0 0.0
        %952 = vmatpush2.msra.mxu0 0.0
        %953 = vmatprep.subr.mxu0 0.0
        %954 = vmatpush2.msra.mxu0 0.0
        %955 = vmatprep.subr.mxu0 0.0
        %956 = vmatpush2.msra.mxu0 0.0
        %957 = vmatprep.subr.mxu0 0.0
        %958 = vmatpush2.msra.mxu0 0.0
        %959 = vmatprep.subr.mxu0 0.0
        %960 = vmatpush2.msra.mxu0 0.0
        %961 = vmatprep.subr.mxu0 0.0
        %962 = vmatpush2.msra.mxu0 0.0
        %963 = vmatprep.subr.mxu0 0.0
        %964 = vmatpush2.msra.mxu0 0.0
        %965 = vmatprep.subr.mxu0 0.0
        %966 = vmatpush2.msra.mxu0 0.0
        %967 = vmatprep.subr.mxu0 0.0
        %968 = vmatpush2.msra.mxu0 0.0
        %969 = vmatprep.subr.mxu0 0.0
        %970 = vmatpush2.msra.mxu0 0.0
        %971 = vmatprep.mubr.f32.mxu0 0.0
        %972 = vmatmul.mubr.f32.gmra.mxu0 %v828
        %v973 = vpop.f32.mrf.mxu0
        %v974 = vadd.f32 0.0, %v973
        %v975 = vpop.f32.mrf.mxu0
        %976 = vdwg.mxu0
        %v977 = vadd.f32 %v813, %v903
        %v978 = vadd.f32 %v814, %v905
        %v979 = vadd.f32 %v815, %v974
        %s980 = scalar_lea.vmem %s1, 20
        %v981 = vld [vmem:[%s980] sm:$0xf]
        %982 = vrot.lane.b32.xlu0 %v169, 108
        %v983 = vpop.permute.xlu0 %982
        %984 = vrot.lane.b32.xlu0 %v176, 108
        %v985 = vpop.permute.xlu0 %984
        %986 = vrot.lane.b32.xlu0 %v170, 108
        %v987 = vpop.permute.xlu0 %986
        %vm988 = vcmask 883712
        %v989 = vsel %vm988, %v983, %v985
        %v990 = vsel %vm988, %v985, %v987
        %v992 = vsel %vm186, %v981, 0
        %v994 = vsel %vm190, %v989, 0
        %v996 = vsel %vm190, %v990, 0
        %v998 = vsel %vm190, %v987, 0
        %1000 = vmatprep.subr.mxu0 0.0
        %1001 = vmatpush1.msra.mxu0 0.0
        %1002 = vmatprep.subr.mxu0 0.0
        %1003 = vmatpush1.msra.mxu0 0.0
        %1004 = vmatprep.subr.mxu0 0.0
        %1005 = vmatpush1.msra.mxu0 0.0
        %1006 = vmatprep.subr.mxu0 0.0
        %1007 = vmatpush1.msra.mxu0 0.0
        %1008 = vmatprep.subr.mxu0 0.0
        %1009 = vmatpush1.msra.mxu0 0.0
        %1010 = vmatprep.subr.mxu0 0.0
        %1011 = vmatpush1.msra.mxu0 0.0
        %1012 = vmatprep.subr.mxu0 0.0
        %1013 = vmatpush1.msra.mxu0 0.0
        %1014 = vmatprep.subr.mxu0 0.0
        %1015 = vmatpush1.msra.mxu0 0.0
        %1016 = vmatprep.subr.mxu0 0.0
        %1017 = vmatpush1.msra.mxu0 0.0
        %1018 = vmatprep.subr.mxu0 0.0
        %1019 = vmatpush1.msra.mxu0 0.0
        %1020 = vmatprep.subr.mxu0 0.0
        %1021 = vmatpush1.msra.mxu0 0.0
        %1022 = vmatprep.subr.mxu0 0.0
        %1023 = vmatpush1.msra.mxu0 0.0
        %1024 = vmatprep.subr.mxu0 0.0
        %1025 = vmatpush1.msra.mxu0 0.0
        %1026 = vmatprep.subr.mxu0 0.0
        %1027 = vmatpush1.msra.mxu0 0.0
        %1028 = vmatprep.subr.mxu0 0.0
        %1029 = vmatpush1.msra.mxu0 0.0
        %1030 = vmatprep.subr.mxu0 %v996
        %1031 = vmatpush1.msra.mxu0 %v994
        %1032 = vmatprep.subr.mxu0 0.0
        %1033 = vmatpush2.msra.mxu0 0.0
        %1034 = vmatprep.subr.mxu0 0.0
        %1035 = vmatpush2.msra.mxu0 0.0
        %1036 = vmatprep.subr.mxu0 0.0
        %1037 = vmatpush2.msra.mxu0 0.0
        %1038 = vmatprep.subr.mxu0 0.0
        %1039 = vmatpush2.msra.mxu0 0.0
        %1040 = vmatprep.subr.mxu0 0.0
        %1041 = vmatpush2.msra.mxu0 0.0
        %1042 = vmatprep.subr.mxu0 0.0
        %1043 = vmatpush2.msra.mxu0 0.0
        %1044 = vmatprep.subr.mxu0 0.0
        %1045 = vmatpush2.msra.mxu0 0.0
        %1046 = vmatprep.subr.mxu0 0.0
        %1047 = vmatpush2.msra.mxu0 0.0
        %1048 = vmatprep.subr.mxu0 0.0
        %1049 = vmatpush2.msra.mxu0 0.0
        %1050 = vmatprep.subr.mxu0 0.0
        %1051 = vmatpush2.msra.mxu0 0.0
        %1052 = vmatprep.subr.mxu0 0.0
        %1053 = vmatpush2.msra.mxu0 0.0
        %1054 = vmatprep.subr.mxu0 0.0
        %1055 = vmatpush2.msra.mxu0 0.0
        %1056 = vmatprep.subr.mxu0 0.0
        %1057 = vmatpush2.msra.mxu0 0.0
        %1058 = vmatprep.subr.mxu0 0.0
        %1059 = vmatpush2.msra.mxu0 0.0
        %1060 = vmatprep.subr.mxu0 0.0
        %1061 = vmatpush2.msra.mxu0 0.0
        %1062 = vmatprep.subr.mxu0 0.0
        %1063 = vmatpush2.msra.mxu0 0.0
        %1064 = vmatprep.mubr.f32.mxu0 0.0
        %1065 = vmatmul.mubr.f32.gmra.mxu0 %v992
        %v1066 = vpop.f32.mrf.mxu0
        %v1067 = vadd.f32 0.0, %v1066
        %v1068 = vpop.f32.mrf.mxu0
        %v1069 = vadd.f32 0.0, %v1068
        %1070 = vdwg.mxu0
        %1071 = vmatprep.subr.mxu0 0.0
        %1072 = vmatpush1.msra.mxu0 0.0
        %1073 = vmatprep.subr.mxu0 0.0
        %1074 = vmatpush1.msra.mxu0 0.0
        %1075 = vmatprep.subr.mxu0 0.0
        %1076 = vmatpush1.msra.mxu0 0.0
        %1077 = vmatprep.subr.mxu0 0.0
        %1078 = vmatpush1.msra.mxu0 0.0
        %1079 = vmatprep.subr.mxu0 0.0
        %1080 = vmatpush1.msra.mxu0 0.0
        %1081 = vmatprep.subr.mxu0 0.0
        %1082 = vmatpush1.msra.mxu0 0.0
        %1083 = vmatprep.subr.mxu0 0.0
        %1084 = vmatpush1.msra.mxu0 0.0
        %1085 = vmatprep.subr.mxu0 0.0
        %1086 = vmatpush1.msra.mxu0 0.0
        %1087 = vmatprep.subr.mxu0 0.0
        %1088 = vmatpush1.msra.mxu0 0.0
        %1089 = vmatprep.subr.mxu0 0.0
        %1090 = vmatpush1.msra.mxu0 0.0
        %1091 = vmatprep.subr.mxu0 0.0
        %1092 = vmatpush1.msra.mxu0 0.0
        %1093 = vmatprep.subr.mxu0 0.0
        %1094 = vmatpush1.msra.mxu0 0.0
        %1095 = vmatprep.subr.mxu0 0.0
        %1096 = vmatpush1.msra.mxu0 0.0
        %1097 = vmatprep.subr.mxu0 0.0
        %1098 = vmatpush1.msra.mxu0 0.0
        %1099 = vmatprep.subr.mxu0 0.0
        %1100 = vmatpush1.msra.mxu0 0.0
        %1101 = vmatprep.subr.mxu0 0.0
        %1102 = vmatpush1.msra.mxu0 %v998
        %1103 = vmatprep.subr.mxu0 0.0
        %1104 = vmatpush2.msra.mxu0 0.0
        %1105 = vmatprep.subr.mxu0 0.0
        %1106 = vmatpush2.msra.mxu0 0.0
        %1107 = vmatprep.subr.mxu0 0.0
        %1108 = vmatpush2.msra.mxu0 0.0
        %1109 = vmatprep.subr.mxu0 0.0
        %1110 = vmatpush2.msra.mxu0 0.0
        %1111 = vmatprep.subr.mxu0 0.0
        %1112 = vmatpush2.msra.mxu0 0.0
        %1113 = vmatprep.subr.mxu0 0.0
        %1114 = vmatpush2.msra.mxu0 0.0
        %1115 = vmatprep.subr.mxu0 0.0
        %1116 = vmatpush2.msra.mxu0 0.0
        %1117 = vmatprep.subr.mxu0 0.0
        %1118 = vmatpush2.msra.mxu0 0.0
        %1119 = vmatprep.subr.mxu0 0.0
        %1120 = vmatpush2.msra.mxu0 0.0
        %1121 = vmatprep.subr.mxu0 0.0
        %1122 = vmatpush2.msra.mxu0 0.0
        %1123 = vmatprep.subr.mxu0 0.0
        %1124 = vmatpush2.msra.mxu0 0.0
        %1125 = vmatprep.subr.mxu0 0.0
        %1126 = vmatpush2.msra.mxu0 0.0
        %1127 = vmatprep.subr.mxu0 0.0
        %1128 = vmatpush2.msra.mxu0 0.0
        %1129 = vmatprep.subr.mxu0 0.0
        %1130 = vmatpush2.msra.mxu0 0.0
        %1131 = vmatprep.subr.mxu0 0.0
        %1132 = vmatpush2.msra.mxu0 0.0
        %1133 = vmatprep.subr.mxu0 0.0
        %1134 = vmatpush2.msra.mxu0 0.0
        %1135 = vmatprep.mubr.f32.mxu0 0.0
        %1136 = vmatmul.mubr.f32.gmra.mxu0 %v992
        %v1137 = vpop.f32.mrf.mxu0
        %v1138 = vadd.f32 0.0, %v1137
        %v1139 = vpop.f32.mrf.mxu0
        %1140 = vdwg.mxu0
        %v1141 = vadd.f32 %v977, %v1067
        %v1142 = vadd.f32 %v978, %v1069
        %v1143 = vadd.f32 %v979, %v1138
        %s1144 = scalar_lea.vmem %s1, 24
        %v1145 = vld [vmem:[%s1144] sm:$0xf]
        %1146 = vrot.lane.b32.xlu0 %v169, 92
        %v1147 = vpop.permute.xlu0 %1146
        %1148 = vrot.lane.b32.xlu0 %v176, 92
        %v1149 = vpop.permute.xlu0 %1148
        %1150 = vrot.lane.b32.xlu0 %v170, 92
        %v1151 = vpop.permute.xlu0 %1150
        %vm1152 = vcmask 752640
        %v1153 = vsel %vm1152, %v1147, %v1149
        %v1154 = vsel %vm1152, %v1149, %v1151
        %v1156 = vsel %vm186, %v1145, 0
        %v1158 = vsel %vm190, %v1153, 0
        %v1160 = vsel %vm190, %v1154, 0
        %v1162 = vsel %vm190, %v1151, 0
        %1164 = vmatprep.subr.mxu0 0.0
        %1165 = vmatpush1.msra.mxu0 0.0
        %1166 = vmatprep.subr.mxu0 0.0
        %1167 = vmatpush1.msra.mxu0 0.0
        %1168 = vmatprep.subr.mxu0 0.0
        %1169 = vmatpush1.msra.mxu0 0.0
        %1170 = vmatprep.subr.mxu0 0.0
        %1171 = vmatpush1.msra.mxu0 0.0
        %1172 = vmatprep.subr.mxu0 0.0
        %1173 = vmatpush1.msra.mxu0 0.0
        %1174 = vmatprep.subr.mxu0 0.0
        %1175 = vmatpush1.msra.mxu0 0.0
        %1176 = vmatprep.subr.mxu0 0.0
        %1177 = vmatpush1.msra.mxu0 0.0
        %1178 = vmatprep.subr.mxu0 0.0
        %1179 = vmatpush1.msra.mxu0 0.0
        %1180 = vmatprep.subr.mxu0 0.0
        %1181 = vmatpush1.msra.mxu0 0.0
        %1182 = vmatprep.subr.mxu0 0.0
        %1183 = vmatpush1.msra.mxu0 0.0
        %1184 = vmatprep.subr.mxu0 0.0
        %1185 = vmatpush1.msra.mxu0 0.0
        %1186 = vmatprep.subr.mxu0 0.0
        %1187 = vmatpush1.msra.mxu0 0.0
        %1188 = vmatprep.subr.mxu0 0.0
        %1189 = vmatpush1.msra.mxu0 0.0
        %1190 = vmatprep.subr.mxu0 0.0
        %1191 = vmatpush1.msra.mxu0 0.0
        %1192 = vmatprep.subr.mxu0 0.0
        %1193 = vmatpush1.msra.mxu0 0.0
        %1194 = vmatprep.subr.mxu0 %v1160
        %1195 = vmatpush1.msra.mxu0 %v1158
        %1196 = vmatprep.subr.mxu0 0.0
        %1197 = vmatpush2.msra.mxu0 0.0
        %1198 = vmatprep.subr.mxu0 0.0
        %1199 = vmatpush2.msra.mxu0 0.0
        %1200 = vmatprep.subr.mxu0 0.0
        %1201 = vmatpush2.msra.mxu0 0.0
        %1202 = vmatprep.subr.mxu0 0.0
        %1203 = vmatpush2.msra.mxu0 0.0
        %1204 = vmatprep.subr.mxu0 0.0
        %1205 = vmatpush2.msra.mxu0 0.0
        %1206 = vmatprep.subr.mxu0 0.0
        %1207 = vmatpush2.msra.mxu0 0.0
        %1208 = vmatprep.subr.mxu0 0.0
        %1209 = vmatpush2.msra.mxu0 0.0
        %1210 = vmatprep.subr.mxu0 0.0
        %1211 = vmatpush2.msra.mxu0 0.0
        %1212 = vmatprep.subr.mxu0 0.0
        %1213 = vmatpush2.msra.mxu0 0.0
        %1214 = vmatprep.subr.mxu0 0.0
        %1215 = vmatpush2.msra.mxu0 0.0
        %1216 = vmatprep.subr.mxu0 0.0
        %1217 = vmatpush2.msra.mxu0 0.0
        %1218 = vmatprep.subr.mxu0 0.0
        %1219 = vmatpush2.msra.mxu0 0.0
        %1220 = vmatprep.subr.mxu0 0.0
        %1221 = vmatpush2.msra.mxu0 0.0
        %1222 = vmatprep.subr.mxu0 0.0
        %1223 = vmatpush2.msra.mxu0 0.0
        %1224 = vmatprep.subr.mxu0 0.0
        %1225 = vmatpush2.msra.mxu0 0.0
        %1226 = vmatprep.subr.mxu0 0.0
        %1227 = vmatpush2.msra.mxu0 0.0
        %1228 = vmatprep.mubr.f32.mxu0 0.0
        %1229 = vmatmul.mubr.f32.gmra.mxu0 %v1156
        %v1230 = vpop.f32.mrf.mxu0
        %v1231 = vadd.f32 0.0, %v1230
        %v1232 = vpop.f32.mrf.mxu0
        %v1233 = vadd.f32 0.0, %v1232
        %1234 = vdwg.mxu0
        %1235 = vmatprep.subr.mxu0 0.0
        %1236 = vmatpush1.msra.mxu0 0.0
        %1237 = vmatprep.subr.mxu0 0.0
        %1238 = vmatpush1.msra.mxu0 0.0
        %1239 = vmatprep.subr.mxu0 0.0
        %1240 = vmatpush1.msra.mxu0 0.0
        %1241 = vmatprep.subr.mxu0 0.0
        %1242 = vmatpush1.msra.mxu0 0.0
        %1243 = vmatprep.subr.mxu0 0.0
        %1244 = vmatpush1.msra.mxu0 0.0
        %1245 = vmatprep.subr.mxu0 0.0
        %1246 = vmatpush1.msra.mxu0 0.0
        %1247 = vmatprep.subr.mxu0 0.0
        %1248 = vmatpush1.msra.mxu0 0.0
        %1249 = vmatprep.subr.mxu0 0.0
        %1250 = vmatpush1.msra.mxu0 0.0
        %1251 = vmatprep.subr.mxu0 0.0
        %1252 = vmatpush1.msra.mxu0 0.0
        %1253 = vmatprep.subr.mxu0 0.0
        %1254 = vmatpush1.msra.mxu0 0.0
        %1255 = vmatprep.subr.mxu0 0.0
        %1256 = vmatpush1.msra.mxu0 0.0
        %1257 = vmatprep.subr.mxu0 0.0
        %1258 = vmatpush1.msra.mxu0 0.0
        %1259 = vmatprep.subr.mxu0 0.0
        %1260 = vmatpush1.msra.mxu0 0.0
        %1261 = vmatprep.subr.mxu0 0.0
        %1262 = vmatpush1.msra.mxu0 0.0
        %1263 = vmatprep.subr.mxu0 0.0
        %1264 = vmatpush1.msra.mxu0 0.0
        %1265 = vmatprep.subr.mxu0 0.0
        %1266 = vmatpush1.msra.mxu0 %v1162
        %1267 = vmatprep.subr.mxu0 0.0
        %1268 = vmatpush2.msra.mxu0 0.0
        %1269 = vmatprep.subr.mxu0 0.0
        %1270 = vmatpush2.msra.mxu0 0.0
        %1271 = vmatprep.subr.mxu0 0.0
        %1272 = vmatpush2.msra.mxu0 0.0
        %1273 = vmatprep.subr.mxu0 0.0
        %1274 = vmatpush2.msra.mxu0 0.0
        %1275 = vmatprep.subr.mxu0 0.0
        %1276 = vmatpush2.msra.mxu0 0.0
        %1277 = vmatprep.subr.mxu0 0.0
        %1278 = vmatpush2.msra.mxu0 0.0
        %1279 = vmatprep.subr.mxu0 0.0
        %1280 = vmatpush2.msra.mxu0 0.0
        %1281 = vmatprep.subr.mxu0 0.0
        %1282 = vmatpush2.msra.mxu0 0.0
        %1283 = vmatprep.subr.mxu0 0.0
        %1284 = vmatpush2.msra.mxu0 0.0
        %1285 = vmatprep.subr.mxu0 0.0
        %1286 = vmatpush2.msra.mxu0 0.0
        %1287 = vmatprep.subr.mxu0 0.0
        %1288 = vmatpush2.msra.mxu0 0.0
        %1289 = vmatprep.subr.mxu0 0.0
        %1290 = vmatpush2.msra.mxu0 0.0
        %1291 = vmatprep.subr.mxu0 0.0
        %1292 = vmatpush2.msra.mxu0 0.0
        %1293 = vmatprep.subr.mxu0 0.0
        %1294 = vmatpush2.msra.mxu0 0.0
        %1295 = vmatprep.subr.mxu0 0.0
        %1296 = vmatpush2.msra.mxu0 0.0
        %1297 = vmatprep.subr.mxu0 0.0
        %1298 = vmatpush2.msra.mxu0 0.0
        %1299 = vmatprep.mubr.f32.mxu0 0.0
        %1300 = vmatmul.mubr.f32.gmra.mxu0 %v1156
        %v1301 = vpop.f32.mrf.mxu0
        %v1302 = vadd.f32 0.0, %v1301
        %v1303 = vpop.f32.mrf.mxu0
        %1304 = vdwg.mxu0
        %v1305 = vadd.f32 %v1141, %v1231
        %v1306 = vadd.f32 %v1142, %v1233
        %v1307 = vadd.f32 %v1143, %v1302
        %s1308 = scalar_lea.vmem %s1, 28
        %v1309 = vld [vmem:[%s1308] sm:$0xf]
        %1310 = vrot.lane.b32.xlu0 %v169, 91
        %v1311 = vpop.permute.xlu0 %1310
        %1312 = vrot.lane.b32.xlu0 %v176, 91
        %v1313 = vpop.permute.xlu0 %1312
        %1314 = vrot.lane.b32.xlu0 %v170, 91
        %v1315 = vpop.permute.xlu0 %1314
        %vm1316 = vcmask 744448
        %v1317 = vsel %vm1316, %v1311, %v1313
        %v1318 = vsel %vm1316, %v1313, %v1315
        %v1320 = vsel %vm186, %v1309, 0
        %v1322 = vsel %vm190, %v1317, 0
        %v1324 = vsel %vm190, %v1318, 0
        %v1326 = vsel %vm190, %v1315, 0
        %1328 = vmatprep.subr.mxu0 0.0
        %1329 = vmatpush1.msra.mxu0 0.0
        %1330 = vmatprep.subr.mxu0 0.0
        %1331 = vmatpush1.msra.mxu0 0.0
        %1332 = vmatprep.subr.mxu0 0.0
        %1333 = vmatpush1.msra.mxu0 0.0
        %1334 = vmatprep.subr.mxu0 0.0
        %1335 = vmatpush1.msra.mxu0 0.0
        %1336 = vmatprep.subr.mxu0 0.0
        %1337 = vmatpush1.msra.mxu0 0.0
        %1338 = vmatprep.subr.mxu0 0.0
        %1339 = vmatpush1.msra.mxu0 0.0
        %1340 = vmatprep.subr.mxu0 0.0
        %1341 = vmatpush1.msra.mxu0 0.0
        %1342 = vmatprep.subr.mxu0 0.0
        %1343 = vmatpush1.msra.mxu0 0.0
        %1344 = vmatprep.subr.mxu0 0.0
        %1345 = vmatpush1.msra.mxu0 0.0
        %1346 = vmatprep.subr.mxu0 0.0
        %1347 = vmatpush1.msra.mxu0 0.0
        %1348 = vmatprep.subr.mxu0 0.0
        %1349 = vmatpush1.msra.mxu0 0.0
        %1350 = vmatprep.subr.mxu0 0.0
        %1351 = vmatpush1.msra.mxu0 0.0
        %1352 = vmatprep.subr.mxu0 0.0
        %1353 = vmatpush1.msra.mxu0 0.0
        %1354 = vmatprep.subr.mxu0 0.0
        %1355 = vmatpush1.msra.mxu0 0.0
        %1356 = vmatprep.subr.mxu0 0.0
        %1357 = vmatpush1.msra.mxu0 0.0
        %1358 = vmatprep.subr.mxu0 %v1324
        %1359 = vmatpush1.msra.mxu0 %v1322
        %1360 = vmatprep.subr.mxu0 0.0
        %1361 = vmatpush2.msra.mxu0 0.0
        %1362 = vmatprep.subr.mxu0 0.0
        %1363 = vmatpush2.msra.mxu0 0.0
        %1364 = vmatprep.subr.mxu0 0.0
        %1365 = vmatpush2.msra.mxu0 0.0
        %1366 = vmatprep.subr.mxu0 0.0
        %1367 = vmatpush2.msra.mxu0 0.0
        %1368 = vmatprep.subr.mxu0 0.0
        %1369 = vmatpush2.msra.mxu0 0.0
        %1370 = vmatprep.subr.mxu0 0.0
        %1371 = vmatpush2.msra.mxu0 0.0
        %1372 = vmatprep.subr.mxu0 0.0
        %1373 = vmatpush2.msra.mxu0 0.0
        %1374 = vmatprep.subr.mxu0 0.0
        %1375 = vmatpush2.msra.mxu0 0.0
        %1376 = vmatprep.subr.mxu0 0.0
        %1377 = vmatpush2.msra.mxu0 0.0
        %1378 = vmatprep.subr.mxu0 0.0
        %1379 = vmatpush2.msra.mxu0 0.0
        %1380 = vmatprep.subr.mxu0 0.0
        %1381 = vmatpush2.msra.mxu0 0.0
        %1382 = vmatprep.subr.mxu0 0.0
        %1383 = vmatpush2.msra.mxu0 0.0
        %1384 = vmatprep.subr.mxu0 0.0
        %1385 = vmatpush2.msra.mxu0 0.0
        %1386 = vmatprep.subr.mxu0 0.0
        %1387 = vmatpush2.msra.mxu0 0.0
        %1388 = vmatprep.subr.mxu0 0.0
        %1389 = vmatpush2.msra.mxu0 0.0
        %1390 = vmatprep.subr.mxu0 0.0
        %1391 = vmatpush2.msra.mxu0 0.0
        %1392 = vmatprep.mubr.f32.mxu0 0.0
        %1393 = vmatmul.mubr.f32.gmra.mxu0 %v1320
        %v1394 = vpop.f32.mrf.mxu0
        %v1395 = vadd.f32 0.0, %v1394
        %v1396 = vpop.f32.mrf.mxu0
        %v1397 = vadd.f32 0.0, %v1396
        %1398 = vdwg.mxu0
        %1399 = vmatprep.subr.mxu0 0.0
        %1400 = vmatpush1.msra.mxu0 0.0
        %1401 = vmatprep.subr.mxu0 0.0
        %1402 = vmatpush1.msra.mxu0 0.0
        %1403 = vmatprep.subr.mxu0 0.0
        %1404 = vmatpush1.msra.mxu0 0.0
        %1405 = vmatprep.subr.mxu0 0.0
        %1406 = vmatpush1.msra.mxu0 0.0
        %1407 = vmatprep.subr.mxu0 0.0
        %1408 = vmatpush1.msra.mxu0 0.0
        %1409 = vmatprep.subr.mxu0 0.0
        %1410 = vmatpush1.msra.mxu0 0.0
        %1411 = vmatprep.subr.mxu0 0.0
        %1412 = vmatpush1.msra.mxu0 0.0
        %1413 = vmatprep.subr.mxu0 0.0
        %1414 = vmatpush1.msra.mxu0 0.0
        %1415 = vmatprep.subr.mxu0 0.0
        %1416 = vmatpush1.msra.mxu0 0.0
        %1417 = vmatprep.subr.mxu0 0.0
        %1418 = vmatpush1.msra.mxu0 0.0
        %1419 = vmatprep.subr.mxu0 0.0
        %1420 = vmatpush1.msra.mxu0 0.0
        %1421 = vmatprep.subr.mxu0 0.0
        %1422 = vmatpush1.msra.mxu0 0.0
        %1423 = vmatprep.subr.mxu0 0.0
        %1424 = vmatpush1.msra.mxu0 0.0
        %1425 = vmatprep.subr.mxu0 0.0
        %1426 = vmatpush1.msra.mxu0 0.0
        %1427 = vmatprep.subr.mxu0 0.0
        %1428 = vmatpush1.msra.mxu0 0.0
        %1429 = vmatprep.subr.mxu0 0.0
        %1430 = vmatpush1.msra.mxu0 %v1326
        %1431 = vmatprep.subr.mxu0 0.0
        %1432 = vmatpush2.msra.mxu0 0.0
        %1433 = vmatprep.subr.mxu0 0.0
        %1434 = vmatpush2.msra.mxu0 0.0
        %1435 = vmatprep.subr.mxu0 0.0
        %1436 = vmatpush2.msra.mxu0 0.0
        %1437 = vmatprep.subr.mxu0 0.0
        %1438 = vmatpush2.msra.mxu0 0.0
        %1439 = vmatprep.subr.mxu0 0.0
        %1440 = vmatpush2.msra.mxu0 0.0
        %1441 = vmatprep.subr.mxu0 0.0
        %1442 = vmatpush2.msra.mxu0 0.0
        %1443 = vmatprep.subr.mxu0 0.0
        %1444 = vmatpush2.msra.mxu0 0.0
        %1445 = vmatprep.subr.mxu0 0.0
        %1446 = vmatpush2.msra.mxu0 0.0
        %1447 = vmatprep.subr.mxu0 0.0
        %1448 = vmatpush2.msra.mxu0 0.0
        %1449 = vmatprep.subr.mxu0 0.0
        %1450 = vmatpush2.msra.mxu0 0.0
        %1451 = vmatprep.subr.mxu0 0.0
        %1452 = vmatpush2.msra.mxu0 0.0
        %1453 = vmatprep.subr.mxu0 0.0
        %1454 = vmatpush2.msra.mxu0 0.0
        %1455 = vmatprep.subr.mxu0 0.0
        %1456 = vmatpush2.msra.mxu0 0.0
        %1457 = vmatprep.subr.mxu0 0.0
        %1458 = vmatpush2.msra.mxu0 0.0
        %1459 = vmatprep.subr.mxu0 0.0
        %1460 = vmatpush2.msra.mxu0 0.0
        %1461 = vmatprep.subr.mxu0 0.0
        %1462 = vmatpush2.msra.mxu0 0.0
        %1463 = vmatprep.mubr.f32.mxu0 0.0
        %1464 = vmatmul.mubr.f32.gmra.mxu0 %v1320
        %v1465 = vpop.f32.mrf.mxu0
        %v1466 = vadd.f32 0.0, %v1465
        %v1467 = vpop.f32.mrf.mxu0
        %1468 = vdwg.mxu0
        %v1469 = vadd.f32 %v1305, %v1395
        %v1470 = vadd.f32 %v1306, %v1397
        %v1471 = vadd.f32 %v1307, %v1466
        %s1472 = scalar_lea.vmem %s1, 32
        %v1473 = vld [vmem:[%s1472] sm:$0xf]
        %1474 = vrot.lane.b32.xlu0 %v169, 90
        %v1475 = vpop.permute.xlu0 %1474
        %1476 = vrot.lane.b32.xlu0 %v176, 90
        %v1477 = vpop.permute.xlu0 %1476
        %1478 = vrot.lane.b32.xlu0 %v170, 90
        %v1479 = vpop.permute.xlu0 %1478
        %vm1480 = vcmask 736256
        %v1481 = vsel %vm1480, %v1475, %v1477
        %v1482 = vsel %vm1480, %v1477, %v1479
        %v1484 = vsel %vm186, %v1473, 0
        %v1486 = vsel %vm190, %v1481, 0
        %v1488 = vsel %vm190, %v1482, 0
        %v1490 = vsel %vm190, %v1479, 0
        %1492 = vmatprep.subr.mxu0 0.0
        %1493 = vmatpush1.msra.mxu0 0.0
        %1494 = vmatprep.subr.mxu0 0.0
        %1495 = vmatpush1.msra.mxu0 0.0
        %1496 = vmatprep.subr.mxu0 0.0
        %1497 = vmatpush1.msra.mxu0 0.0
        %1498 = vmatprep.subr.mxu0 0.0
        %1499 = vmatpush1.msra.mxu0 0.0
        %1500 = vmatprep.subr.mxu0 0.0
        %1501 = vmatpush1.msra.mxu0 0.0
        %1502 = vmatprep.subr.mxu0 0.0
        %1503 = vmatpush1.msra.mxu0 0.0
        %1504 = vmatprep.subr.mxu0 0.0
        %1505 = vmatpush1.msra.mxu0 0.0
        %1506 = vmatprep.subr.mxu0 0.0
        %1507 = vmatpush1.msra.mxu0 0.0
        %1508 = vmatprep.subr.mxu0 0.0
        %1509 = vmatpush1.msra.mxu0 0.0
        %1510 = vmatprep.subr.mxu0 0.0
        %1511 = vmatpush1.msra.mxu0 0.0
        %1512 = vmatprep.subr.mxu0 0.0
        %1513 = vmatpush1.msra.mxu0 0.0
        %1514 = vmatprep.subr.mxu0 0.0
        %1515 = vmatpush1.msra.mxu0 0.0
        %1516 = vmatprep.subr.mxu0 0.0
        %1517 = vmatpush1.msra.mxu0 0.0
        %1518 = vmatprep.subr.mxu0 0.0
        %1519 = vmatpush1.msra.mxu0 0.0
        %1520 = vmatprep.subr.mxu0 0.0
        %1521 = vmatpush1.msra.mxu0 0.0
        %1522 = vmatprep.subr.mxu0 %v1488
        %1523 = vmatpush1.msra.mxu0 %v1486
        %1524 = vmatprep.subr.mxu0 0.0
        %1525 = vmatpush2.msra.mxu0 0.0
        %1526 = vmatprep.subr.mxu0 0.0
        %1527 = vmatpush2.msra.mxu0 0.0
        %1528 = vmatprep.subr.mxu0 0.0
        %1529 = vmatpush2.msra.mxu0 0.0
        %1530 = vmatprep.subr.mxu0 0.0
        %1531 = vmatpush2.msra.mxu0 0.0
        %1532 = vmatprep.subr.mxu0 0.0
        %1533 = vmatpush2.msra.mxu0 0.0
        %1534 = vmatprep.subr.mxu0 0.0
        %1535 = vmatpush2.msra.mxu0 0.0
        %1536 = vmatprep.subr.mxu0 0.0
        %1537 = vmatpush2.msra.mxu0 0.0
        %1538 = vmatprep.subr.mxu0 0.0
        %1539 = vmatpush2.msra.mxu0 0.0
        %1540 = vmatprep.subr.mxu0 0.0
        %1541 = vmatpush2.msra.mxu0 0.0
        %1542 = vmatprep.subr.mxu0 0.0
        %1543 = vmatpush2.msra.mxu0 0.0
        %1544 = vmatprep.subr.mxu0 0.0
        %1545 = vmatpush2.msra.mxu0 0.0
        %1546 = vmatprep.subr.mxu0 0.0
        %1547 = vmatpush2.msra.mxu0 0.0
        %1548 = vmatprep.subr.mxu0 0.0
        %1549 = vmatpush2.msra.mxu0 0.0
        %1550 = vmatprep.subr.mxu0 0.0
        %1551 = vmatpush2.msra.mxu0 0.0
        %1552 = vmatprep.subr.mxu0 0.0
        %1553 = vmatpush2.msra.mxu0 0.0
        %1554 = vmatprep.subr.mxu0 0.0
        %1555 = vmatpush2.msra.mxu0 0.0
        %1556 = vmatprep.mubr.f32.mxu0 0.0
        %1557 = vmatmul.mubr.f32.gmra.mxu0 %v1484
        %v1558 = vpop.f32.mrf.mxu0
        %v1559 = vadd.f32 0.0, %v1558
        %v1560 = vpop.f32.mrf.mxu0
        %v1561 = vadd.f32 0.0, %v1560
        %1562 = vdwg.mxu0
        %1563 = vmatprep.subr.mxu0 0.0
        %1564 = vmatpush1.msra.mxu0 0.0
        %1565 = vmatprep.subr.mxu0 0.0
        %1566 = vmatpush1.msra.mxu0 0.0
        %1567 = vmatprep.subr.mxu0 0.0
        %1568 = vmatpush1.msra.mxu0 0.0
        %1569 = vmatprep.subr.mxu0 0.0
        %1570 = vmatpush1.msra.mxu0 0.0
        %1571 = vmatprep.subr.mxu0 0.0
        %1572 = vmatpush1.msra.mxu0 0.0
        %1573 = vmatprep.subr.mxu0 0.0
        %1574 = vmatpush1.msra.mxu0 0.0
        %1575 = vmatprep.subr.mxu0 0.0
        %1576 = vmatpush1.msra.mxu0 0.0
        %1577 = vmatprep.subr.mxu0 0.0
        %1578 = vmatpush1.msra.mxu0 0.0
        %1579 = vmatprep.subr.mxu0 0.0
        %1580 = vmatpush1.msra.mxu0 0.0
        %1581 = vmatprep.subr.mxu0 0.0
        %1582 = vmatpush1.msra.mxu0 0.0
        %1583 = vmatprep.subr.mxu0 0.0
        %1584 = vmatpush1.msra.mxu0 0.0
        %1585 = vmatprep.subr.mxu0 0.0
        %1586 = vmatpush1.msra.mxu0 0.0
        %1587 = vmatprep.subr.mxu0 0.0
        %1588 = vmatpush1.msra.mxu0 0.0
        %1589 = vmatprep.subr.mxu0 0.0
        %1590 = vmatpush1.msra.mxu0 0.0
        %1591 = vmatprep.subr.mxu0 0.0
        %1592 = vmatpush1.msra.mxu0 0.0
        %1593 = vmatprep.subr.mxu0 0.0
        %1594 = vmatpush1.msra.mxu0 %v1490
        %1595 = vmatprep.subr.mxu0 0.0
        %1596 = vmatpush2.msra.mxu0 0.0
        %1597 = vmatprep.subr.mxu0 0.0
        %1598 = vmatpush2.msra.mxu0 0.0
        %1599 = vmatprep.subr.mxu0 0.0
        %1600 = vmatpush2.msra.mxu0 0.0
        %1601 = vmatprep.subr.mxu0 0.0
        %1602 = vmatpush2.msra.mxu0 0.0
        %1603 = vmatprep.subr.mxu0 0.0
        %1604 = vmatpush2.msra.mxu0 0.0
        %1605 = vmatprep.subr.mxu0 0.0
        %1606 = vmatpush2.msra.mxu0 0.0
        %1607 = vmatprep.subr.mxu0 0.0
        %1608 = vmatpush2.msra.mxu0 0.0
        %1609 = vmatprep.subr.mxu0 0.0
        %1610 = vmatpush2.msra.mxu0 0.0
        %1611 = vmatprep.subr.mxu0 0.0
        %1612 = vmatpush2.msra.mxu0 0.0
        %1613 = vmatprep.subr.mxu0 0.0
        %1614 = vmatpush2.msra.mxu0 0.0
        %1615 = vmatprep.subr.mxu0 0.0
        %1616 = vmatpush2.msra.mxu0 0.0
        %1617 = vmatprep.subr.mxu0 0.0
        %1618 = vmatpush2.msra.mxu0 0.0
        %1619 = vmatprep.subr.mxu0 0.0
        %1620 = vmatpush2.msra.mxu0 0.0
        %1621 = vmatprep.subr.mxu0 0.0
        %1622 = vmatpush2.msra.mxu0 0.0
        %1623 = vmatprep.subr.mxu0 0.0
        %1624 = vmatpush2.msra.mxu0 0.0
        %1625 = vmatprep.subr.mxu0 0.0
        %1626 = vmatpush2.msra.mxu0 0.0
        %1627 = vmatprep.mubr.f32.mxu0 0.0
        %1628 = vmatmul.mubr.f32.gmra.mxu0 %v1484
        %v1629 = vpop.f32.mrf.mxu0
        %v1630 = vadd.f32 0.0, %v1629
        %v1631 = vpop.f32.mrf.mxu0
        %1632 = vdwg.mxu0
        %v1633 = vadd.f32 %v1469, %v1559
        %v1634 = vadd.f32 %v1470, %v1561
        %v1635 = vadd.f32 %v1471, %v1630
        %v1636 = vld [vmem:[%s2] sm:$0xf]
        %1638 = vset.pattern.permute.xlu0 0
        %1639 = vperm.xlu0 %1638, %v1636
        %v1640 = vpop.permute.xlu0 %1639
        %v1642 = vadd.f32 %v1633, %v1640
        %v1643 = vadd.f32 %v1634, %v1640
        %v1644 = vadd.f32 %v1635, %v1640
        %vm1645 = vcmp.ge.f32.partialorder %v1642, 0.0
        %vm1646 = vcmp.ge.f32.partialorder %v1643, 0.0
        %vm1647 = vcmp.ge.f32.partialorder %v1644, 0.0
        %v1648 = vmul.f32 %v1642, 0.01
        %v1649 = vmul.f32 %v1643, 0.01
        %v1650 = vmul.f32 %v1644, 0.01
        %v1651 = vsel %vm1645, %v1642, %v1648
        %v1652 = vsel %vm1646, %v1643, %v1649
        %v1653 = vsel %vm1647, %v1644, %v1650
        %v1656 = vcombine.low %v1651, %v1652
        %1658 = vst [vmem:[%s163] sm:$0xff] %v1656
        %vm1659 = vcmask 257024
        %1660 = vst.msk [vmem:[%s163 + $0x8] sm:$0xf] %vm1659, %v1653
        %s1661 = sand.u32 %s93, 1
        %s1662 = scalar_lea.sflag [#allocation3], %s1661
        %s1663 = sand.u32 %s93, 1
        %s1664 = smul.addr %s1663, 12
        %s1665 = scalar_lea.vmem [#allocation2], %s1664
        // Predicated region
        $region33: #{tpu_custom_call.1} parent=31 // pred_check
          %p1666 = pneg %p103
        $region34: #{tpu_custom_call.1} parent=31 // pred_check_branch
          %1668 = sbr.rel (%p1666) target = $region36
        $region35: #{tpu_custom_call.1} parent=31 // pred_region
          %s1670 = ssub.s32 192, 192
          %1671 = vsyncadd %s1662, %s1670
          %s1672 = smul.addr %s17, 3
          %s1673 = smul.addr %s1672, 64
          %s1674 = scalar_lea.hbm %s3, %s1673
          %s1676 = sshll.u32 %s1665, 4
          %s1677 = int_to_ptr.vmem [resolvable:$true] %s1676
          %1679 = dma.vmem_to_hbm [thread:$0]  %s1677, 192, %s1674, %s1662
        $region36: #{tpu_custom_call.1} parent=31 // pred_fallthru
          _
      $region32: #{tpu_custom_call.1} parent=5 // pred_fallthru
        _
      %p1680 = scmp.le.s32.totalorder 2, %s12
      // Predicated region
      $region37: #{tpu_custom_call.1} parent=5 // pred_check
        %p1681 = pneg %p1680
      $region38: #{tpu_custom_call.1} parent=5 // pred_check_branch
        %1683 = sbr.rel (%p1681) target = $region40
      $region39: #{tpu_custom_call.1} parent=5 // pred_region
        %s1684 = ssub.s32 %s12, 2
        // Predicated region
        $region41: #{tpu_custom_call.1} parent=39 // pred_check
          %p1685 = pneg %p109
        $region42: #{tpu_custom_call.1} parent=39 // pred_check_branch
          %1687 = sbr.rel (%p1685) target = $region44
        $region43: #{tpu_custom_call.1} parent=39 // pred_region
          %s1688 = sand.u32 %s94, 1
          %s1689 = scalar_lea.sflag [#allocation3], %s1688
          %s1690 = sand.u32 %s94, 1
          %s1691 = smul.addr %s1690, 12
          %s1692 = scalar_lea.vmem [#allocation2], %s1691
          %1693 = dma.done %s1689, 192
        $region44: #{tpu_custom_call.1} parent=39 // pred_fallthru
          _
      $region40: #{tpu_custom_call.1} parent=5 // pred_fallthru
        _
    $region6: #{tpu_custom_call.1} parent=1 // loop_footer
      %s16 = sadd.s32 1, %s12
    $region7: #{tpu_custom_call.1} parent=1 // loop_footer_branch
      %11 = sbr.rel target = $region3
    $region8: #{tpu_custom_call.1} parent=1 // loop_exit
      _
    %1694 = vsyncpa [#allocation3], 1
    %s1695 = scalar_lea.sflag [#allocation3], 1
    %1696 = vsyncpa %s1695, 1

</llo_original>
